<compile_context>
chip_gen: v6e
topology: v6e:2x2x1
jax: 0.10.0
libtpu: 0.0.40
codegen_flags: <defaults>
</compile_context>

<pallas_src>
import functools
import math

import jax
import jax.numpy as jnp
from jax import lax
from jax.experimental import pallas as pl
from jax.experimental.pallas import tpu as pltpu


# ----------------------------- Pallas kernel ---------------------------------

def _sampler_kernel(
    # inputs (one batch block of BB rows per grid step)
    init_ref,      # (BB, D)       initial states for this batch block
    noise_ref,     # (T*BB, D)     noise, time-major within the block
    w1_ref,        # (2, D, H)     [forward, backward] first-layer weights
    w2_ref,        # (2, H, D)     [forward, backward] second-layer weights  (dt folded in)
    b2_ref,        # (2, 1, D)     [forward, backward] second-layer biases   (dt folded in)
    biasf_ref,     # (T, H)        b1f + (t*dt)*tf       (per step)
    biasb_ref,     # (T*BB, H)     b1b + ((t+1)*dt)*tb   (per step, per row; block-shared)
    # outputs
    traj_ref,      # ((T+1)*BB, D) trajectories, time-major within the block
    logp_ref,      # (T*BB, 2)     [:,0] = logpf, [:,1] = logpb
    *, std_f, std_b,
):
    BB, D = init_ref.shape
    T = biasf_ref.shape[0]

    # Hoist loop-invariant loads / constants out of the recurrence.
    w1f = w1_ref[0]            # (D, H)
    w2f = w2_ref[0]            # (H, D)   already scaled by dt
    b2f = b2_ref[0]            # (1, D)   already scaled by dt
    const_f = -0.5 * D * math.log(2.0 * math.pi) - D * math.log(std_f)
    const_b = -0.5 * D * math.log(2.0 * math.pi) - D * math.log(std_b)
    half_inv_var_b = 0.5 / (std_b * std_b)

    # trajectories[:, 0] = initial_states
    traj_ref[0:BB, :] = init_ref[...]

    # ---- phase 1: the sequential recurrence (the only true critical path) ----
    def step(t, cur):
        row0 = pl.multiple_of(t * BB, BB)
        bias_f = biasf_ref[pl.ds(t, 1), :]                                # (1, H)
        h_f = jnp.tanh(
            jnp.dot(cur, w1f, preferred_element_type=jnp.float32) + bias_f)
        mean_f = cur + jnp.dot(h_f, w2f, preferred_element_type=jnp.float32) + b2f
        nxt = mean_f + std_f * noise_ref[pl.ds(row0, BB), :]              # (BB, D)
        traj_ref[pl.ds(pl.multiple_of((t + 1) * BB, BB), BB), :] = nxt
        return nxt

    lax.fori_loop(0, T, step, init_ref[...],
                  unroll=(True if T <= 16 else 8))

    # ---- phase 2: everything off the recurrence, batched over all T steps ----
    states = traj_ref[pl.ds(BB, T * BB), :]       # (T*BB, D)  next_state at each step
    prev = traj_ref[pl.ds(0, T * BB), :]          # (T*BB, D)  cur_state  at each step

    # log pf(next_state | cur_state): (next - mean_f)/std_f == noise by construction.
    nz = noise_ref[...]
    logpf = const_f - 0.5 * jnp.sum(nz * nz, axis=-1, keepdims=True)

    # backward conditional at (next_state, next_time): one batched MLP pass
    h_b = jnp.tanh(
        jnp.dot(states, w1_ref[1], preferred_element_type=jnp.float32)
        + biasb_ref[...])
    mean_b = states - (jnp.dot(h_b, w2_ref[1], preferred_element_type=jnp.float32)
                       + b2_ref[1])
    resid = prev - mean_b
    logpb = const_b - half_inv_var_b * jnp.sum(resid * resid, axis=-1, keepdims=True)

    logp_ref[...] = jnp.concatenate([logpf, logpb], axis=-1)


# ------------------------------ wrapper ---------------------------------------

def get_forward_trajectory(initial_states, noise, params, *, dt, std_f, std_b):
    """Pallas implementation of SamplerModel.get_forward_trajectory.

    initial_states: (B, D) f32
    noise:          (T, B, D) f32   (matches torch.randn(T, B, D))
    returns: trajectories (B, T+1, D), logpf (B, T), logpb (B, T)
    """
    B, D = initial_states.shape
    T = noise.shape[0]
    H = params["w1f"].shape[1]

    # Batch blocks of 8 rows (sublane aligned).  Each block runs its own independent
    # recurrence on a "parallel" grid axis (both TCs on v7x when B > 8).
    BB = 8
    B_pad = ((B + BB - 1) // BB) * BB
    NB = B_pad // BB
    if B_pad != B:
        initial_states = jnp.pad(initial_states, ((0, B_pad - B), (0, 0)))
        noise = jnp.pad(noise, ((0, 0), (0, B_pad - B), (0, 0)))

    # Pack the many tiny parameter arrays into a few inputs (fewer DMAs).
    # dt is folded into the second layer: mean = x +/- (tanh(.) @ (dt*w2) + dt*b2).
    w1 = jnp.stack([params["w1f"], params["w1b"]])                  # (2, D, H)
    w2 = jnp.stack([params["w2f"], params["w2b"]]) * dt             # (2, H, D)
    b2 = jnp.stack([params["b2f"], params["b2b"]]) * dt             # (2, 1, D)
    t_cur = (jnp.arange(T, dtype=jnp.float32) * dt)[:, None]        # (T, 1)
    bias_f = params["b1f"] + t_cur * params["tf"]                   # (T, H)
    t_next = jnp.repeat((jnp.arange(T, dtype=jnp.float32) + 1.0) * dt, BB)[:, None]
    bias_b = params["b1b"] + t_next * params["tb"]                  # (T*BB, H), block-shared

    # noise: (T, B_pad, D) -> block-major, time-major-within-block (NB*T*BB, D)
    noise_blk = noise.reshape(T, NB, BB, D).transpose(1, 0, 2, 3).reshape(NB * T * BB, D)

    kernel = functools.partial(_sampler_kernel, std_f=std_f, std_b=std_b)

    traj_flat, logp_flat = pl.pallas_call(
        kernel,
        out_shape=(
            jax.ShapeDtypeStruct((NB * (T + 1) * BB, D), jnp.float32),
            jax.ShapeDtypeStruct((NB * T * BB, 2), jnp.float32),
        ),
        grid_spec=pltpu.PrefetchScalarGridSpec(
            num_scalar_prefetch=0,
            grid=(NB,),  # independent batch blocks; recurrence lives inside the kernel
            in_specs=[
                pl.BlockSpec((BB, D), lambda b: (b, 0)),              # initial_states
                pl.BlockSpec((T * BB, D), lambda b: (b, 0)),          # noise (all steps)
                pl.BlockSpec((2, D, H), lambda b: (0, 0, 0)),         # w1 fwd/bwd
                pl.BlockSpec((2, H, D), lambda b: (0, 0, 0)),         # w2 fwd/bwd (dt folded)
                pl.BlockSpec((2, 1, D), lambda b: (0, 0, 0)),         # b2 fwd/bwd (dt folded)
                pl.BlockSpec((T, H), lambda b: (0, 0)),               # per-step fwd bias
                pl.BlockSpec((T * BB, H), lambda b: (0, 0)),          # per-row bwd bias (shared)
            ],
            out_specs=[
                pl.BlockSpec(((T + 1) * BB, D), lambda b: (b, 0)),    # trajectories
                pl.BlockSpec((T * BB, 2), lambda b: (b, 0)),          # [logpf, logpb]
            ],
        ),
        compiler_params=pltpu.CompilerParams(
            dimension_semantics=("parallel",),
        ),
    )(initial_states, noise_blk, w1, w2, b2, bias_f, bias_b)

    # Glue: assemble PyTorch-shaped outputs (cheap XLA reshapes/transposes).
    trajectories = (traj_flat.reshape(NB, T + 1, BB, D)
                    .transpose(0, 2, 1, 3).reshape(B_pad, T + 1, D)[:B])
    logp = (logp_flat.reshape(NB, T, BB, 2)
            .transpose(0, 2, 1, 3).reshape(B_pad, T, 2)[:B])
    return trajectories, logp[..., 0], logp[..., 1]

# TODO(synk): exploration_schedule (add_to_std_in_param_dict) not plumbed; forward() is
# exercised with exploration_schedule=None, matching the default call path.


# --------------------------- pure-JAX reference --------------------------------

def _gauss_logprob(x, mean, std):
    z = (x - mean) / std
    d = x.shape[-1]
    const = -0.5 * d * math.log(2.0 * math.pi) - d * math.log(std)
    return const - 0.5 * jnp.sum(z * z, axis=-1)


def _ref_forward(initial_states, noise, params, *, dt, std_f, std_b):
    def drift(x, t, w1, b1, tv, w2, b2):
        return jnp.tanh(x @ w1 + b1 + t * tv) @ w2 + b2

    def step(cur, xs):
        t_idx, nz = xs
        cur_time = t_idx * dt
        next_time = cur_time + dt
        mean_f = cur + dt * drift(cur, cur_time, params["w1f"], params["b1f"],
                                  params["tf"], params["w2f"], params["b2f"])
        nxt = mean_f + std_f * nz
        lpf = _gauss_logprob(nxt, mean_f, std_f)
        mean_b = nxt - dt * drift(nxt, next_time, params["w1b"], params["b1b"],
                                  params["tb"], params["w2b"], params["b2b"])
        lpb = _gauss_logprob(cur, mean_b, std_b)
        return nxt, (nxt, lpf, lpb)

    T = noise.shape[0]
    t_idx = jnp.arange(T, dtype=jnp.float32)
    _, (traj_tm, lpf_tm, lpb_tm) = lax.scan(step, initial_states, (t_idx, noise))
    trajectories = jnp.concatenate(
        [initial_states[:, None, :], jnp.transpose(traj_tm, (1, 0, 2))], axis=1)
    return trajectories, lpf_tm.T, lpb_tm.T


# ----------------------------------- main --------------------------------------

if __name__ == "__main__":
    B = 8            # batch_size
    D = 32           # sample_dim (energy_function.data_ndim)
    H = 32           # drift MLP hidden
    T = 8            # trajectory_length
    dt = 1.0 / T
    sigma = 1.0
    std_f = sigma * math.sqrt(dt)
    std_b = sigma * math.sqrt(dt)

    key = jax.random.PRNGKey(0)
    keys = jax.random.split(key, 12)

    # deterministic synthetic parameters for the Gaussian conditional densities
    params = {
        "w1f": jax.random.normal(keys[0], (D, H), jnp.float32) * 0.1,
        "b1f": jax.random.normal(keys[1], (1, H), jnp.float32) * 0.1,
        "tf":  jax.random.normal(keys[2], (1, H), jnp.float32) * 0.1,
        "w2f": jax.random.normal(keys[3], (H, D), jnp.float32) * 0.1,
        "b2f": jax.random.normal(keys[4], (1, D), jnp.float32) * 0.1,
        "w1b": jax.random.normal(keys[5], (D, H), jnp.float32) * 0.1,
        "b1b": jax.random.normal(keys[6], (1, H), jnp.float32) * 0.1,
        "tb":  jax.random.normal(keys[7], (1, H), jnp.float32) * 0.1,
        "w2b": jax.random.normal(keys[8], (H, D), jnp.float32) * 0.1,
        "b2b": jax.random.normal(keys[9], (1, D), jnp.float32) * 0.1,
    }

    # inputs: initial states from the (standard-normal) prior, fixed noise
    initial_states = jax.random.normal(keys[10], (B, D), jnp.float32)
    noise = jax.random.normal(keys[11], (T, B, D), jnp.float32)

    traj, logpf, logpb = jax.block_until_ready(
        get_forward_trajectory(initial_states, noise, params,
                               dt=dt, std_f=std_f, std_b=std_b))

    assert traj.shape == (B, T + 1, D)
    assert logpf.shape == (B, T)
    assert logpb.shape == (B, T)

    # correctness check against pure-JAX reference
    traj_r, logpf_r, logpb_r = _ref_forward(initial_states, noise, params,
                                            dt=dt, std_f=std_f, std_b=std_b)
    assert jnp.allclose(traj, traj_r, atol=1e-3, rtol=1e-3)
    assert jnp.allclose(logpf, logpf_r, atol=1e-2, rtol=1e-3)
    assert jnp.allclose(logpb, logpb_r, atol=1e-2, rtol=1e-3)

    print("KERNEL_OK")
</pallas_src>

<mosaic_0001>
module attributes {stable_mosaic.version = 11 : i64} {
  func.func @_sampler_kernel(%arg0: i32, %arg1: memref<8x32xf32, #tpu.memory_space<vmem>>, %arg2: memref<64x32xf32, #tpu.memory_space<vmem>>, %arg3: memref<2x32x32xf32, #tpu.memory_space<vmem>>, %arg4: memref<2x32x32xf32, #tpu.memory_space<vmem>>, %arg5: memref<2x1x32xf32, #tpu.memory_space<vmem>>, %arg6: memref<8x32xf32, #tpu.memory_space<vmem>>, %arg7: memref<64x32xf32, #tpu.memory_space<vmem>>, %arg8: memref<72x32xf32, #tpu.memory_space<vmem>>, %arg9: memref<64x2xf32, #tpu.memory_space<vmem>>) attributes {dimension_semantics = [#tpu.dimension_semantics<parallel>], iteration_bounds = array<i64: 1>, scalar_prefetch = 0 : i64, scratch_operands = 0 : i64, tpu.core_type = #tpu.core_type<tc>, window_params = [{transform_indices = @transform_0, window_bounds = array<i64: 8, 32>}, {transform_indices = @transform_1, window_bounds = array<i64: 64, 32>}, {pipeline_mode = #tpu.pipeline_mode<synchronous>, transform_indices = @transform_2, window_bounds = array<i64: 2, 32, 32>}, {pipeline_mode = #tpu.pipeline_mode<synchronous>, transform_indices = @transform_3, window_bounds = array<i64: 2, 32, 32>}, {pipeline_mode = #tpu.pipeline_mode<synchronous>, transform_indices = @transform_4, window_bounds = array<i64: 2, 1, 32>}, {pipeline_mode = #tpu.pipeline_mode<synchronous>, transform_indices = @transform_5, window_bounds = array<i64: 8, 32>}, {pipeline_mode = #tpu.pipeline_mode<synchronous>, transform_indices = @transform_6, window_bounds = array<i64: 64, 32>}, {transform_indices = @transform_7, window_bounds = array<i64: 72, 32>}, {transform_indices = @transform_8, window_bounds = array<i64: 64, 2>}]} {
    %c0 = arith.constant 0 : index
    %c0_0 = arith.constant 0 : index
    %c0_1 = arith.constant 0 : index
    %0 = vector.load %arg3[%c0, %c0_0, %c0_1] : memref<2x32x32xf32, #tpu.memory_space<vmem>>, vector<1x32x32xf32>
    %1 = vector.shape_cast %0 : vector<1x32x32xf32> to vector<32x32xf32>
    %c0_2 = arith.constant 0 : index
    %c0_3 = arith.constant 0 : index
    %c0_4 = arith.constant 0 : index
    %2 = vector.load %arg4[%c0_2, %c0_3, %c0_4] : memref<2x32x32xf32, #tpu.memory_space<vmem>>, vector<1x32x32xf32>
    %3 = vector.shape_cast %2 : vector<1x32x32xf32> to vector<32x32xf32>
    %c0_5 = arith.constant 0 : index
    %c0_6 = arith.constant 0 : index
    %c0_7 = arith.constant 0 : index
    %4 = vector.load %arg5[%c0_5, %c0_6, %c0_7] : memref<2x1x32xf32, #tpu.memory_space<vmem>>, vector<1x1x32xf32>
    %5 = vector.shape_cast %4 : vector<1x1x32xf32> to vector<1x32xf32>
    %c0_8 = arith.constant 0 : index
    %c0_9 = arith.constant 0 : index
    %6 = vector.load %arg1[%c0_8, %c0_9] : memref<8x32xf32, #tpu.memory_space<vmem>>, vector<8x32xf32>
    %c0_10 = arith.constant 0 : index
    %c0_11 = arith.constant 0 : index
    %7 = vector.load %arg8[%c0_10, %c0_11] : memref<72x32xf32, #tpu.memory_space<vmem>>, vector<8x32xf32>
    tpu.vector_store %arg8[%c0_10, %c0_11], %6 {strides = array<i32>} : memref<72x32xf32, #tpu.memory_space<vmem>>, vector<8x32xf32>,
    %c0_12 = arith.constant 0 : index
    %c0_13 = arith.constant 0 : index
    %8 = vector.load %arg1[%c0_12, %c0_13] : memref<8x32xf32, #tpu.memory_space<vmem>>, vector<8x32xf32>
    %c0_i32 = arith.constant 0 : i32
    %c8_i32 = arith.constant 8 : i32
    %9 = arith.muli %c0_i32, %c8_i32 : i32
    %10 = tpu.assume_multiple %9, 8 : i32
    %11 = arith.index_cast %c0_i32 : i32 to index
    %c0_14 = arith.constant 0 : index
    %12 = vector.load %arg6[%11, %c0_14] : memref<8x32xf32, #tpu.memory_space<vmem>>, vector<1x32xf32>
    %cst = arith.constant dense<0.000000e+00> : vector<8x32xf32>
    %13 = tpu.matmul %8, %1, %cst {dimension_numbers = #tpu.dot_dimension_numbers<[1], [0], [0], [1], [0, 0, 1, 1], [], []>} : vector<8x32xf32>, vector<32x32xf32>, vector<8x32xf32> -> vector<8x32xf32>
    %14 = vector.broadcast %12 : vector<1x32xf32> to vector<8x32xf32>
    %15 = arith.addf %13, %14 : vector<8x32xf32>
    %16 = math.tanh %15 : vector<8x32xf32>
    %cst_15 = arith.constant dense<0.000000e+00> : vector<8x32xf32>
    %17 = tpu.matmul %16, %3, %cst_15 {dimension_numbers = #tpu.dot_dimension_numbers<[1], [0], [0], [1], [0, 0, 1, 1], [], []>} : vector<8x32xf32>, vector<32x32xf32>, vector<8x32xf32> -> vector<8x32xf32>
    %18 = arith.addf %8, %17 : vector<8x32xf32>
    %19 = vector.broadcast %5 : vector<1x32xf32> to vector<8x32xf32>
    %20 = arith.addf %18, %19 : vector<8x32xf32>
    %21 = arith.index_cast %10 : i32 to index
    %c0_16 = arith.constant 0 : index
    %22 = vector.load %arg2[%21, %c0_16] : memref<64x32xf32, #tpu.memory_space<vmem>>, vector<8x32xf32>
    %cst_17 = arith.constant 0.353553385 : f32
    %23 = vector.broadcast %cst_17 : f32 to vector<8x32xf32>
    %24 = arith.mulf %23, %22 : vector<8x32xf32>
    %25 = arith.addf %20, %24 : vector<8x32xf32>
    %c1_i32 = arith.constant 1 : i32
    %26 = arith.addi %c0_i32, %c1_i32 : i32
    %c8_i32_18 = arith.constant 8 : i32
    %27 = arith.muli %26, %c8_i32_18 : i32
    %28 = tpu.assume_multiple %27, 8 : i32
    %29 = arith.index_cast %28 : i32 to index
    %c0_19 = arith.constant 0 : index
    %30 = vector.load %arg8[%29, %c0_19] : memref<72x32xf32, #tpu.memory_space<vmem>>, vector<8x32xf32>
    tpu.vector_store %arg8[%29, %c0_19], %25 {strides = array<i32>} : memref<72x32xf32, #tpu.memory_space<vmem>>, vector<8x32xf32>,
    %c1_i32_20 = arith.constant 1 : i32
    %c8_i32_21 = arith.constant 8 : i32
    %31 = arith.muli %c1_i32_20, %c8_i32_21 : i32
    %32 = tpu.assume_multiple %31, 8 : i32
    %33 = arith.index_cast %c1_i32_20 : i32 to index
    %c0_22 = arith.constant 0 : index
    %34 = vector.load %arg6[%33, %c0_22] : memref<8x32xf32, #tpu.memory_space<vmem>>, vector<1x32xf32>
    %cst_23 = arith.constant dense<0.000000e+00> : vector<8x32xf32>
    %35 = tpu.matmul %25, %1, %cst_23 {dimension_numbers = #tpu.dot_dimension_numbers<[1], [0], [0], [1], [0, 0, 1, 1], [], []>} : vector<8x32xf32>, vector<32x32xf32>, vector<8x32xf32> -> vector<8x32xf32>
    %36 = vector.broadcast %34 : vector<1x32xf32> to vector<8x32xf32>
    %37 = arith.addf %35, %36 : vector<8x32xf32>
    %38 = math.tanh %37 : vector<8x32xf32>
    %cst_24 = arith.constant dense<0.000000e+00> : vector<8x32xf32>
    %39 = tpu.matmul %38, %3, %cst_24 {dimension_numbers = #tpu.dot_dimension_numbers<[1], [0], [0], [1], [0, 0, 1, 1], [], []>} : vector<8x32xf32>, vector<32x32xf32>, vector<8x32xf32> -> vector<8x32xf32>
    %40 = arith.addf %25, %39 : vector<8x32xf32>
    %41 = vector.broadcast %5 : vector<1x32xf32> to vector<8x32xf32>
    %42 = arith.addf %40, %41 : vector<8x32xf32>
    %43 = arith.index_cast %32 : i32 to index
    %c0_25 = arith.constant 0 : index
    %44 = vector.load %arg2[%43, %c0_25] : memref<64x32xf32, #tpu.memory_space<vmem>>, vector<8x32xf32>
    %cst_26 = arith.constant 0.353553385 : f32
    %45 = vector.broadcast %cst_26 : f32 to vector<8x32xf32>
    %46 = arith.mulf %45, %44 : vector<8x32xf32>
    %47 = arith.addf %42, %46 : vector<8x32xf32>
    %c1_i32_27 = arith.constant 1 : i32
    %48 = arith.addi %c1_i32_20, %c1_i32_27 : i32
    %c8_i32_28 = arith.constant 8 : i32
    %49 = arith.muli %48, %c8_i32_28 : i32
    %50 = tpu.assume_multiple %49, 8 : i32
    %51 = arith.index_cast %50 : i32 to index
    %c0_29 = arith.constant 0 : index
    %52 = vector.load %arg8[%51, %c0_29] : memref<72x32xf32, #tpu.memory_space<vmem>>, vector<8x32xf32>
    tpu.vector_store %arg8[%51, %c0_29], %47 {strides = array<i32>} : memref<72x32xf32, #tpu.memory_space<vmem>>, vector<8x32xf32>,
    %c2_i32 = arith.constant 2 : i32
    %c8_i32_30 = arith.constant 8 : i32
    %53 = arith.muli %c2_i32, %c8_i32_30 : i32
    %54 = tpu.assume_multiple %53, 8 : i32
    %55 = arith.index_cast %c2_i32 : i32 to index
    %c0_31 = arith.constant 0 : index
    %56 = vector.load %arg6[%55, %c0_31] : memref<8x32xf32, #tpu.memory_space<vmem>>, vector<1x32xf32>
    %cst_32 = arith.constant dense<0.000000e+00> : vector<8x32xf32>
    %57 = tpu.matmul %47, %1, %cst_32 {dimension_numbers = #tpu.dot_dimension_numbers<[1], [0], [0], [1], [0, 0, 1, 1], [], []>} : vector<8x32xf32>, vector<32x32xf32>, vector<8x32xf32> -> vector<8x32xf32>
    %58 = vector.broadcast %56 : vector<1x32xf32> to vector<8x32xf32>
    %59 = arith.addf %57, %58 : vector<8x32xf32>
    %60 = math.tanh %59 : vector<8x32xf32>
    %cst_33 = arith.constant dense<0.000000e+00> : vector<8x32xf32>
    %61 = tpu.matmul %60, %3, %cst_33 {dimension_numbers = #tpu.dot_dimension_numbers<[1], [0], [0], [1], [0, 0, 1, 1], [], []>} : vector<8x32xf32>, vector<32x32xf32>, vector<8x32xf32> -> vector<8x32xf32>
    %62 = arith.addf %47, %61 : vector<8x32xf32>
    %63 = vector.broadcast %5 : vector<1x32xf32> to vector<8x32xf32>
    %64 = arith.addf %62, %63 : vector<8x32xf32>
    %65 = arith.index_cast %54 : i32 to index
    %c0_34 = arith.constant 0 : index
    %66 = vector.load %arg2[%65, %c0_34] : memref<64x32xf32, #tpu.memory_space<vmem>>, vector<8x32xf32>
    %cst_35 = arith.constant 0.353553385 : f32
    %67 = vector.broadcast %cst_35 : f32 to vector<8x32xf32>
    %68 = arith.mulf %67, %66 : vector<8x32xf32>
    %69 = arith.addf %64, %68 : vector<8x32xf32>
    %c1_i32_36 = arith.constant 1 : i32
    %70 = arith.addi %c2_i32, %c1_i32_36 : i32
    %c8_i32_37 = arith.constant 8 : i32
    %71 = arith.muli %70, %c8_i32_37 : i32
    %72 = tpu.assume_multiple %71, 8 : i32
    %73 = arith.index_cast %72 : i32 to index
    %c0_38 = arith.constant 0 : index
    %74 = vector.load %arg8[%73, %c0_38] : memref<72x32xf32, #tpu.memory_space<vmem>>, vector<8x32xf32>
    tpu.vector_store %arg8[%73, %c0_38], %69 {strides = array<i32>} : memref<72x32xf32, #tpu.memory_space<vmem>>, vector<8x32xf32>,
    %c3_i32 = arith.constant 3 : i32
    %c8_i32_39 = arith.constant 8 : i32
    %75 = arith.muli %c3_i32, %c8_i32_39 : i32
    %76 = tpu.assume_multiple %75, 8 : i32
    %77 = arith.index_cast %c3_i32 : i32 to index
    %c0_40 = arith.constant 0 : index
    %78 = vector.load %arg6[%77, %c0_40] : memref<8x32xf32, #tpu.memory_space<vmem>>, vector<1x32xf32>
    %cst_41 = arith.constant dense<0.000000e+00> : vector<8x32xf32>
    %79 = tpu.matmul %69, %1, %cst_41 {dimension_numbers = #tpu.dot_dimension_numbers<[1], [0], [0], [1], [0, 0, 1, 1], [], []>} : vector<8x32xf32>, vector<32x32xf32>, vector<8x32xf32> -> vector<8x32xf32>
    %80 = vector.broadcast %78 : vector<1x32xf32> to vector<8x32xf32>
    %81 = arith.addf %79, %80 : vector<8x32xf32>
    %82 = math.tanh %81 : vector<8x32xf32>
    %cst_42 = arith.constant dense<0.000000e+00> : vector<8x32xf32>
    %83 = tpu.matmul %82, %3, %cst_42 {dimension_numbers = #tpu.dot_dimension_numbers<[1], [0], [0], [1], [0, 0, 1, 1], [], []>} : vector<8x32xf32>, vector<32x32xf32>, vector<8x32xf32> -> vector<8x32xf32>
    %84 = arith.addf %69, %83 : vector<8x32xf32>
    %85 = vector.broadcast %5 : vector<1x32xf32> to vector<8x32xf32>
    %86 = arith.addf %84, %85 : vector<8x32xf32>
    %87 = arith.index_cast %76 : i32 to index
    %c0_43 = arith.constant 0 : index
    %88 = vector.load %arg2[%87, %c0_43] : memref<64x32xf32, #tpu.memory_space<vmem>>, vector<8x32xf32>
    %cst_44 = arith.constant 0.353553385 : f32
    %89 = vector.broadcast %cst_44 : f32 to vector<8x32xf32>
    %90 = arith.mulf %89, %88 : vector<8x32xf32>
    %91 = arith.addf %86, %90 : vector<8x32xf32>
    %c1_i32_45 = arith.constant 1 : i32
    %92 = arith.addi %c3_i32, %c1_i32_45 : i32
    %c8_i32_46 = arith.constant 8 : i32
    %93 = arith.muli %92, %c8_i32_46 : i32
    %94 = tpu.assume_multiple %93, 8 : i32
    %95 = arith.index_cast %94 : i32 to index
    %c0_47 = arith.constant 0 : index
    %96 = vector.load %arg8[%95, %c0_47] : memref<72x32xf32, #tpu.memory_space<vmem>>, vector<8x32xf32>
    tpu.vector_store %arg8[%95, %c0_47], %91 {strides = array<i32>} : memref<72x32xf32, #tpu.memory_space<vmem>>, vector<8x32xf32>,
    %c4_i32 = arith.constant 4 : i32
    %c8_i32_48 = arith.constant 8 : i32
    %97 = arith.muli %c4_i32, %c8_i32_48 : i32
    %98 = tpu.assume_multiple %97, 8 : i32
    %99 = arith.index_cast %c4_i32 : i32 to index
    %c0_49 = arith.constant 0 : index
    %100 = vector.load %arg6[%99, %c0_49] : memref<8x32xf32, #tpu.memory_space<vmem>>, vector<1x32xf32>
    %cst_50 = arith.constant dense<0.000000e+00> : vector<8x32xf32>
    %101 = tpu.matmul %91, %1, %cst_50 {dimension_numbers = #tpu.dot_dimension_numbers<[1], [0], [0], [1], [0, 0, 1, 1], [], []>} : vector<8x32xf32>, vector<32x32xf32>, vector<8x32xf32> -> vector<8x32xf32>
    %102 = vector.broadcast %100 : vector<1x32xf32> to vector<8x32xf32>
    %103 = arith.addf %101, %102 : vector<8x32xf32>
    %104 = math.tanh %103 : vector<8x32xf32>
    %cst_51 = arith.constant dense<0.000000e+00> : vector<8x32xf32>
    %105 = tpu.matmul %104, %3, %cst_51 {dimension_numbers = #tpu.dot_dimension_numbers<[1], [0], [0], [1], [0, 0, 1, 1], [], []>} : vector<8x32xf32>, vector<32x32xf32>, vector<8x32xf32> -> vector<8x32xf32>
    %106 = arith.addf %91, %105 : vector<8x32xf32>
    %107 = vector.broadcast %5 : vector<1x32xf32> to vector<8x32xf32>
    %108 = arith.addf %106, %107 : vector<8x32xf32>
    %109 = arith.index_cast %98 : i32 to index
    %c0_52 = arith.constant 0 : index
    %110 = vector.load %arg2[%109, %c0_52] : memref<64x32xf32, #tpu.memory_space<vmem>>, vector<8x32xf32>
    %cst_53 = arith.constant 0.353553385 : f32
    %111 = vector.broadcast %cst_53 : f32 to vector<8x32xf32>
    %112 = arith.mulf %111, %110 : vector<8x32xf32>
    %113 = arith.addf %108, %112 : vector<8x32xf32>
    %c1_i32_54 = arith.constant 1 : i32
    %114 = arith.addi %c4_i32, %c1_i32_54 : i32
    %c8_i32_55 = arith.constant 8 : i32
    %115 = arith.muli %114, %c8_i32_55 : i32
    %116 = tpu.assume_multiple %115, 8 : i32
    %117 = arith.index_cast %116 : i32 to index
    %c0_56 = arith.constant 0 : index
    %118 = vector.load %arg8[%117, %c0_56] : memref<72x32xf32, #tpu.memory_space<vmem>>, vector<8x32xf32>
    tpu.vector_store %arg8[%117, %c0_56], %113 {strides = array<i32>} : memref<72x32xf32, #tpu.memory_space<vmem>>, vector<8x32xf32>,
    %c5_i32 = arith.constant 5 : i32
    %c8_i32_57 = arith.constant 8 : i32
    %119 = arith.muli %c5_i32, %c8_i32_57 : i32
    %120 = tpu.assume_multiple %119, 8 : i32
    %121 = arith.index_cast %c5_i32 : i32 to index
    %c0_58 = arith.constant 0 : index
    %122 = vector.load %arg6[%121, %c0_58] : memref<8x32xf32, #tpu.memory_space<vmem>>, vector<1x32xf32>
    %cst_59 = arith.constant dense<0.000000e+00> : vector<8x32xf32>
    %123 = tpu.matmul %113, %1, %cst_59 {dimension_numbers = #tpu.dot_dimension_numbers<[1], [0], [0], [1], [0, 0, 1, 1], [], []>} : vector<8x32xf32>, vector<32x32xf32>, vector<8x32xf32> -> vector<8x32xf32>
    %124 = vector.broadcast %122 : vector<1x32xf32> to vector<8x32xf32>
    %125 = arith.addf %123, %124 : vector<8x32xf32>
    %126 = math.tanh %125 : vector<8x32xf32>
    %cst_60 = arith.constant dense<0.000000e+00> : vector<8x32xf32>
    %127 = tpu.matmul %126, %3, %cst_60 {dimension_numbers = #tpu.dot_dimension_numbers<[1], [0], [0], [1], [0, 0, 1, 1], [], []>} : vector<8x32xf32>, vector<32x32xf32>, vector<8x32xf32> -> vector<8x32xf32>
    %128 = arith.addf %113, %127 : vector<8x32xf32>
    %129 = vector.broadcast %5 : vector<1x32xf32> to vector<8x32xf32>
    %130 = arith.addf %128, %129 : vector<8x32xf32>
    %131 = arith.index_cast %120 : i32 to index
    %c0_61 = arith.constant 0 : index
    %132 = vector.load %arg2[%131, %c0_61] : memref<64x32xf32, #tpu.memory_space<vmem>>, vector<8x32xf32>
    %cst_62 = arith.constant 0.353553385 : f32
    %133 = vector.broadcast %cst_62 : f32 to vector<8x32xf32>
    %134 = arith.mulf %133, %132 : vector<8x32xf32>
    %135 = arith.addf %130, %134 : vector<8x32xf32>
    %c1_i32_63 = arith.constant 1 : i32
    %136 = arith.addi %c5_i32, %c1_i32_63 : i32
    %c8_i32_64 = arith.constant 8 : i32
    %137 = arith.muli %136, %c8_i32_64 : i32
    %138 = tpu.assume_multiple %137, 8 : i32
    %139 = arith.index_cast %138 : i32 to index
    %c0_65 = arith.constant 0 : index
    %140 = vector.load %arg8[%139, %c0_65] : memref<72x32xf32, #tpu.memory_space<vmem>>, vector<8x32xf32>
    tpu.vector_store %arg8[%139, %c0_65], %135 {strides = array<i32>} : memref<72x32xf32, #tpu.memory_space<vmem>>, vector<8x32xf32>,
    %c6_i32 = arith.constant 6 : i32
    %c8_i32_66 = arith.constant 8 : i32
    %141 = arith.muli %c6_i32, %c8_i32_66 : i32
    %142 = tpu.assume_multiple %141, 8 : i32
    %143 = arith.index_cast %c6_i32 : i32 to index
    %c0_67 = arith.constant 0 : index
    %144 = vector.load %arg6[%143, %c0_67] : memref<8x32xf32, #tpu.memory_space<vmem>>, vector<1x32xf32>
    %cst_68 = arith.constant dense<0.000000e+00> : vector<8x32xf32>
    %145 = tpu.matmul %135, %1, %cst_68 {dimension_numbers = #tpu.dot_dimension_numbers<[1], [0], [0], [1], [0, 0, 1, 1], [], []>} : vector<8x32xf32>, vector<32x32xf32>, vector<8x32xf32> -> vector<8x32xf32>
    %146 = vector.broadcast %144 : vector<1x32xf32> to vector<8x32xf32>
    %147 = arith.addf %145, %146 : vector<8x32xf32>
    %148 = math.tanh %147 : vector<8x32xf32>
    %cst_69 = arith.constant dense<0.000000e+00> : vector<8x32xf32>
    %149 = tpu.matmul %148, %3, %cst_69 {dimension_numbers = #tpu.dot_dimension_numbers<[1], [0], [0], [1], [0, 0, 1, 1], [], []>} : vector<8x32xf32>, vector<32x32xf32>, vector<8x32xf32> -> vector<8x32xf32>
    %150 = arith.addf %135, %149 : vector<8x32xf32>
    %151 = vector.broadcast %5 : vector<1x32xf32> to vector<8x32xf32>
    %152 = arith.addf %150, %151 : vector<8x32xf32>
    %153 = arith.index_cast %142 : i32 to index
    %c0_70 = arith.constant 0 : index
    %154 = vector.load %arg2[%153, %c0_70] : memref<64x32xf32, #tpu.memory_space<vmem>>, vector<8x32xf32>
    %cst_71 = arith.constant 0.353553385 : f32
    %155 = vector.broadcast %cst_71 : f32 to vector<8x32xf32>
    %156 = arith.mulf %155, %154 : vector<8x32xf32>
    %157 = arith.addf %152, %156 : vector<8x32xf32>
    %c1_i32_72 = arith.constant 1 : i32
    %158 = arith.addi %c6_i32, %c1_i32_72 : i32
    %c8_i32_73 = arith.constant 8 : i32
    %159 = arith.muli %158, %c8_i32_73 : i32
    %160 = tpu.assume_multiple %159, 8 : i32
    %161 = arith.index_cast %160 : i32 to index
    %c0_74 = arith.constant 0 : index
    %162 = vector.load %arg8[%161, %c0_74] : memref<72x32xf32, #tpu.memory_space<vmem>>, vector<8x32xf32>
    tpu.vector_store %arg8[%161, %c0_74], %157 {strides = array<i32>} : memref<72x32xf32, #tpu.memory_space<vmem>>, vector<8x32xf32>,
    %c7_i32 = arith.constant 7 : i32
    %c8_i32_75 = arith.constant 8 : i32
    %163 = arith.muli %c7_i32, %c8_i32_75 : i32
    %164 = tpu.assume_multiple %163, 8 : i32
    %165 = arith.index_cast %c7_i32 : i32 to index
    %c0_76 = arith.constant 0 : index
    %166 = vector.load %arg6[%165, %c0_76] : memref<8x32xf32, #tpu.memory_space<vmem>>, vector<1x32xf32>
    %cst_77 = arith.constant dense<0.000000e+00> : vector<8x32xf32>
    %167 = tpu.matmul %157, %1, %cst_77 {dimension_numbers = #tpu.dot_dimension_numbers<[1], [0], [0], [1], [0, 0, 1, 1], [], []>} : vector<8x32xf32>, vector<32x32xf32>, vector<8x32xf32> -> vector<8x32xf32>
    %168 = vector.broadcast %166 : vector<1x32xf32> to vector<8x32xf32>
    %169 = arith.addf %167, %168 : vector<8x32xf32>
    %170 = math.tanh %169 : vector<8x32xf32>
    %cst_78 = arith.constant dense<0.000000e+00> : vector<8x32xf32>
    %171 = tpu.matmul %170, %3, %cst_78 {dimension_numbers = #tpu.dot_dimension_numbers<[1], [0], [0], [1], [0, 0, 1, 1], [], []>} : vector<8x32xf32>, vector<32x32xf32>, vector<8x32xf32> -> vector<8x32xf32>
    %172 = arith.addf %157, %171 : vector<8x32xf32>
    %173 = vector.broadcast %5 : vector<1x32xf32> to vector<8x32xf32>
    %174 = arith.addf %172, %173 : vector<8x32xf32>
    %175 = arith.index_cast %164 : i32 to index
    %c0_79 = arith.constant 0 : index
    %176 = vector.load %arg2[%175, %c0_79] : memref<64x32xf32, #tpu.memory_space<vmem>>, vector<8x32xf32>
    %cst_80 = arith.constant 0.353553385 : f32
    %177 = vector.broadcast %cst_80 : f32 to vector<8x32xf32>
    %178 = arith.mulf %177, %176 : vector<8x32xf32>
    %179 = arith.addf %174, %178 : vector<8x32xf32>
    %c1_i32_81 = arith.constant 1 : i32
    %180 = arith.addi %c7_i32, %c1_i32_81 : i32
    %c8_i32_82 = arith.constant 8 : i32
    %181 = arith.muli %180, %c8_i32_82 : i32
    %182 = tpu.assume_multiple %181, 8 : i32
    %183 = arith.index_cast %182 : i32 to index
    %c0_83 = arith.constant 0 : index
    %184 = vector.load %arg8[%183, %c0_83] : memref<72x32xf32, #tpu.memory_space<vmem>>, vector<8x32xf32>
    tpu.vector_store %arg8[%183, %c0_83], %179 {strides = array<i32>} : memref<72x32xf32, #tpu.memory_space<vmem>>, vector<8x32xf32>,
    %c8_i32_84 = arith.constant 8 : i32
    %c8 = arith.constant 8 : index
    %c0_85 = arith.constant 0 : index
    %185 = vector.load %arg8[%c8, %c0_85] : memref<72x32xf32, #tpu.memory_space<vmem>>, vector<64x32xf32>
    %c0_86 = arith.constant 0 : index
    %c0_87 = arith.constant 0 : index
    %186 = vector.load %arg8[%c0_86, %c0_87] : memref<72x32xf32, #tpu.memory_space<vmem>>, vector<64x32xf32>
    %c0_88 = arith.constant 0 : index
    %c0_89 = arith.constant 0 : index
    %187 = vector.load %arg2[%c0_88, %c0_89] : memref<64x32xf32, #tpu.memory_space<vmem>>, vector<64x32xf32>
    %188 = arith.mulf %187, %187 : vector<64x32xf32>
    %cst_90 = arith.constant dense<0.000000e+00> : vector<64xf32>
    %189 = vector.multi_reduction <add>, %188, %cst_90 [1] : vector<64x32xf32> to vector<64xf32>
    %190 = vector.shape_cast %189 : vector<64xf32> to vector<64x1xf32>
    %cst_91 = arith.constant 5.000000e-01 : f32
    %191 = vector.broadcast %cst_91 : f32 to vector<64x1xf32>
    %192 = arith.mulf %191, %190 : vector<64x1xf32>
    %cst_92 = arith.constant 3.86503172 : f32
    %193 = vector.broadcast %cst_92 : f32 to vector<64x1xf32>
    %194 = arith.subf %193, %192 : vector<64x1xf32>
    %c1 = arith.constant 1 : index
    %c0_93 = arith.constant 0 : index
    %c0_94 = arith.constant 0 : index
    %195 = vector.load %arg3[%c1, %c0_93, %c0_94] : memref<2x32x32xf32, #tpu.memory_space<vmem>>, vector<1x32x32xf32>
    %196 = vector.shape_cast %195 : vector<1x32x32xf32> to vector<32x32xf32>
    %cst_95 = arith.constant dense<0.000000e+00> : vector<64x32xf32>
    %197 = tpu.matmul %185, %196, %cst_95 {dimension_numbers = #tpu.dot_dimension_numbers<[1], [0], [0], [1], [0, 0, 1, 1], [], []>} : vector<64x32xf32>, vector<32x32xf32>, vector<64x32xf32> -> vector<64x32xf32>
    %c0_96 = arith.constant 0 : index
    %c0_97 = arith.constant 0 : index
    %198 = vector.load %arg7[%c0_96, %c0_97] : memref<64x32xf32, #tpu.memory_space<vmem>>, vector<64x32xf32>
    %199 = arith.addf %197, %198 : vector<64x32xf32>
    %200 = math.tanh %199 : vector<64x32xf32>
    %c1_98 = arith.constant 1 : index
    %c0_99 = arith.constant 0 : index
    %c0_100 = arith.constant 0 : index
    %201 = vector.load %arg4[%c1_98, %c0_99, %c0_100] : memref<2x32x32xf32, #tpu.memory_space<vmem>>, vector<1x32x32xf32>
    %202 = vector.shape_cast %201 : vector<1x32x32xf32> to vector<32x32xf32>
    %cst_101 = arith.constant dense<0.000000e+00> : vector<64x32xf32>
    %203 = tpu.matmul %200, %202, %cst_101 {dimension_numbers = #tpu.dot_dimension_numbers<[1], [0], [0], [1], [0, 0, 1, 1], [], []>} : vector<64x32xf32>, vector<32x32xf32>, vector<64x32xf32> -> vector<64x32xf32>
    %c1_102 = arith.constant 1 : index
    %c0_103 = arith.constant 0 : index
    %c0_104 = arith.constant 0 : index
    %204 = vector.load %arg5[%c1_102, %c0_103, %c0_104] : memref<2x1x32xf32, #tpu.memory_space<vmem>>, vector<1x1x32xf32>
    %205 = vector.shape_cast %204 : vector<1x1x32xf32> to vector<1x32xf32>
    %206 = vector.broadcast %205 : vector<1x32xf32> to vector<64x32xf32>
    %207 = arith.addf %203, %206 : vector<64x32xf32>
    %208 = arith.subf %185, %207 : vector<64x32xf32>
    %209 = arith.subf %186, %208 : vector<64x32xf32>
    %210 = arith.mulf %209, %209 : vector<64x32xf32>
    %cst_105 = arith.constant dense<0.000000e+00> : vector<64xf32>
    %211 = vector.multi_reduction <add>, %210, %cst_105 [1] : vector<64x32xf32> to vector<64xf32>
    %212 = vector.shape_cast %211 : vector<64xf32> to vector<64x1xf32>
    %cst_106 = arith.constant 4.000000e+00 : f32
    %213 = vector.broadcast %cst_106 : f32 to vector<64x1xf32>
    %214 = arith.mulf %213, %212 : vector<64x1xf32>
    %cst_107 = arith.constant 3.86503172 : f32
    %215 = vector.broadcast %cst_107 : f32 to vector<64x1xf32>
    %216 = arith.subf %215, %214 : vector<64x1xf32>
    %217 = tpu.concatenate %194, %216 in 1 : vector<64x1xf32>, vector<64x1xf32> -> vector<64x2xf32>
    %c0_108 = arith.constant 0 : index
    %c0_109 = arith.constant 0 : index
    %218 = vector.load %arg9[%c0_108, %c0_109] : memref<64x2xf32, #tpu.memory_space<vmem>>, vector<64x2xf32>
    tpu.vector_store %arg9[%c0_108, %c0_109], %217 {strides = array<i32>} : memref<64x2xf32, #tpu.memory_space<vmem>>, vector<64x2xf32>,
    return
  }
  func.func @transform_0(%arg0: i32) -> (i32, i32) {
    %c0_i32 = arith.constant 0 : i32
    %c0_i32_0 = arith.constant 0 : i32
    return %arg0, %c0_i32 : i32, i32
  }
  func.func @transform_1(%arg0: i32) -> (i32, i32) {
    %c0_i32 = arith.constant 0 : i32
    %c0_i32_0 = arith.constant 0 : i32
    return %arg0, %c0_i32 : i32, i32
  }
  func.func @transform_2(%arg0: i32) -> (i32, i32, i32) {
    %c0_i32 = arith.constant 0 : i32
    %c0_i32_0 = arith.constant 0 : i32
    %c0_i32_1 = arith.constant 0 : i32
    %c0_i32_2 = arith.constant 0 : i32
    return %c0_i32, %c0_i32_0, %c0_i32_1 : i32, i32, i32
  }
  func.func @transform_3(%arg0: i32) -> (i32, i32, i32) {
    %c0_i32 = arith.constant 0 : i32
    %c0_i32_0 = arith.constant 0 : i32
    %c0_i32_1 = arith.constant 0 : i32
    %c0_i32_2 = arith.constant 0 : i32
    return %c0_i32, %c0_i32_0, %c0_i32_1 : i32, i32, i32
  }
  func.func @transform_4(%arg0: i32) -> (i32, i32, i32) {
    %c0_i32 = arith.constant 0 : i32
    %c0_i32_0 = arith.constant 0 : i32
    %c0_i32_1 = arith.constant 0 : i32
    %c0_i32_2 = arith.constant 0 : i32
    return %c0_i32, %c0_i32_0, %c0_i32_1 : i32, i32, i32
  }
  func.func @transform_5(%arg0: i32) -> (i32, i32) {
    %c0_i32 = arith.constant 0 : i32
    %c0_i32_0 = arith.constant 0 : i32
    %c0_i32_1 = arith.constant 0 : i32
    return %c0_i32, %c0_i32_0 : i32, i32
  }
  func.func @transform_6(%arg0: i32) -> (i32, i32) {
    %c0_i32 = arith.constant 0 : i32
    %c0_i32_0 = arith.constant 0 : i32
    %c0_i32_1 = arith.constant 0 : i32
    return %c0_i32, %c0_i32_0 : i32, i32
  }
  func.func @transform_7(%arg0: i32) -> (i32, i32) {
    %c0_i32 = arith.constant 0 : i32
    %c0_i32_0 = arith.constant 0 : i32
    return %arg0, %c0_i32 : i32, i32
  }
  func.func @transform_8(%arg0: i32) -> (i32, i32) {
    %c0_i32 = arith.constant 0 : i32
    %c0_i32_0 = arith.constant 0 : i32
    return %arg0, %c0_i32 : i32, i32
  }
}

</mosaic_0001>

<llo_original>
// kernel: tpu_custom_call.1
$region0: #{tpu_custom_call.1}
  #allocation0 [shape = 'u32[]', space=smem, size = 0x4, offset = 0x4, fixed_abs, tag = 'smem constant byte address 0x4 - core index']
  #allocation1 [shape = 'u32[144,128]{1,0:T(1,128)}', space=vmem, size = 0x12000, scoped, tag = 'internal scratch']
  %s0 = inlined_call_operand.vmem [shape: f32[8,32], index: 0, kind: input, shape index: {}]
  %s1 = inlined_call_operand.vmem [shape: f32[64,32], index: 1, kind: input, shape index: {}]
  %s2 = inlined_call_operand.vmem [shape: f32[2,32,32], index: 2, kind: input, shape index: {}]
  %s3 = inlined_call_operand.vmem [shape: f32[2,32,32], index: 3, kind: input, shape index: {}]
  %s4 = inlined_call_operand.vmem [shape: f32[2,1,32], index: 4, kind: input, shape index: {}]
  %s5 = inlined_call_operand.vmem [shape: f32[8,32], index: 5, kind: input, shape index: {}]
  %s6 = inlined_call_operand.vmem [shape: f32[64,32], index: 6, kind: input, shape index: {}]
  %s7 = inlined_call_operand.vmem [shape: f32[72,32], index: 7, kind: output, shape index: {0}]
  %s8 = inlined_call_operand.vmem [shape: f32[64,2], index: 8, kind: output, shape index: {1}]
  %9 = xla_tuple %s7, %s8
  %s10 = sld [smem:[#allocation0]]
  $region46: #{tpu_custom_call.1} parent=0
    _
  %s12 = ssub.s32 1, %s10
  %s13 = scalar_select 0, %s12, %s10
  // Predicated region
  $region2: #{tpu_custom_call.1} parent=0 // pred_check
    _
  $region3: #{tpu_custom_call.1} parent=0 // pred_check_branch
    %15 = sbr.rel (0) target = $region5
  $region4: #{tpu_custom_call.1} parent=0 // pred_region
    _
  $region5: #{tpu_custom_call.1} parent=0 // pred_fallthru
    _
  // Predicated region
  $region6: #{tpu_custom_call.1} parent=0 // pred_check
    _
  $region7: #{tpu_custom_call.1} parent=0 // pred_check_branch
    %17 = sbr.rel (0) target = $region9
  $region8: #{tpu_custom_call.1} parent=0 // pred_region
    _
  $region9: #{tpu_custom_call.1} parent=0 // pred_fallthru
    _
  // Predicated region
  $region10: #{tpu_custom_call.1} parent=0 // pred_check
    _
  $region11: #{tpu_custom_call.1} parent=0 // pred_check_branch
    %19 = sbr.rel (0) target = $region13
  $region12: #{tpu_custom_call.1} parent=0 // pred_region
    _
  $region13: #{tpu_custom_call.1} parent=0 // pred_fallthru
    _
  // Predicated region
  $region14: #{tpu_custom_call.1} parent=0 // pred_check
    _
  $region15: #{tpu_custom_call.1} parent=0 // pred_check_branch
    %21 = sbr.rel (0) target = $region17
  $region16: #{tpu_custom_call.1} parent=0 // pred_region
    _
  $region17: #{tpu_custom_call.1} parent=0 // pred_fallthru
    _
  // Predicated region
  $region18: #{tpu_custom_call.1} parent=0 // pred_check
    _
  $region19: #{tpu_custom_call.1} parent=0 // pred_check_branch
    %23 = sbr.rel (0) target = $region21
  $region20: #{tpu_custom_call.1} parent=0 // pred_region
    _
  $region21: #{tpu_custom_call.1} parent=0 // pred_fallthru
    _
  // Predicated region
  $region22: #{tpu_custom_call.1} parent=0 // pred_check
    _
  $region23: #{tpu_custom_call.1} parent=0 // pred_check_branch
    %25 = sbr.rel (0) target = $region25
  $region24: #{tpu_custom_call.1} parent=0 // pred_region
    _
  $region25: #{tpu_custom_call.1} parent=0 // pred_fallthru
    _
  // Predicated region
  $region26: #{tpu_custom_call.1} parent=0 // pred_check
    _
  $region27: #{tpu_custom_call.1} parent=0 // pred_check_branch
    %27 = sbr.rel (0) target = $region29
  $region28: #{tpu_custom_call.1} parent=0 // pred_region
    _
  $region29: #{tpu_custom_call.1} parent=0 // pred_fallthru
    _
  %v28 = vld [vmem:[%s2] sm:$0xff]
  %v29 = vld [vmem:[%s2 + $0x8] sm:$0xff]
  %v30 = vld [vmem:[%s2 + $0x10] sm:$0xff]
  %v31 = vld [vmem:[%s2 + $0x18] sm:$0xff]
  %v32 = vld [vmem:[%s3] sm:$0xff]
  %v33 = vld [vmem:[%s3 + $0x8] sm:$0xff]
  %v34 = vld [vmem:[%s3 + $0x10] sm:$0xff]
  %v35 = vld [vmem:[%s3 + $0x18] sm:$0xff]
  %v36 = vld [vmem:[%s4] sm:$0x1]
  %v37 = vld [vmem:[%s0] sm:$0xff]
  %vm38 = vcmask 261120
  %39 = vst.msk [vmem:[%s7] sm:$0xff] %vm38, %v37
  %v40 = vld [vmem:[%s0] sm:$0xff]
  %v41 = vld [vmem:[%s5] sm:$0x1]
  %v42 = vlaneseq
  %v43 = vshrl.u32 %v42, 7
  %v44 = vsub.s32 0, %v43
  %v45 = vrot.slane %v41, %v44
  %v47 = vsel %vm38, %v40, 0
  %49 = vmatprep.subr.mxu0 0.0
  %50 = vmatpush1.msra.mxu0 0.0
  %51 = vmatprep.subr.mxu0 0.0
  %52 = vmatpush1.msra.mxu0 0.0
  %53 = vmatprep.subr.mxu0 0.0
  %54 = vmatpush1.msra.mxu0 0.0
  %55 = vmatprep.subr.mxu0 0.0
  %56 = vmatpush1.msra.mxu0 0.0
  %57 = vmatprep.subr.mxu0 0.0
  %58 = vmatpush1.msra.mxu0 0.0
  %59 = vmatprep.subr.mxu0 0.0
  %60 = vmatpush1.msra.mxu0 0.0
  %61 = vmatprep.subr.mxu0 0.0
  %62 = vmatpush1.msra.mxu0 0.0
  %63 = vmatprep.subr.mxu0 0.0
  %64 = vmatpush1.msra.mxu0 0.0
  %65 = vmatprep.subr.mxu0 0.0
  %66 = vmatpush1.msra.mxu0 0.0
  %67 = vmatprep.subr.mxu0 0.0
  %68 = vmatpush1.msra.mxu0 0.0
  %69 = vmatprep.subr.mxu0 0.0
  %70 = vmatpush1.msra.mxu0 0.0
  %71 = vmatprep.subr.mxu0 0.0
  %72 = vmatpush1.msra.mxu0 0.0
  %73 = vmatprep.subr.mxu0 0.0
  %74 = vmatpush1.msra.mxu0 %v31
  %75 = vmatprep.subr.mxu0 0.0
  %76 = vmatpush1.msra.mxu0 %v30
  %77 = vmatprep.subr.mxu0 0.0
  %78 = vmatpush1.msra.mxu0 %v29
  %79 = vmatprep.subr.mxu0 0.0
  %80 = vmatpush1.msra.mxu0 %v28
  %81 = vmatprep.subr.mxu0 0.0
  %82 = vmatpush2.msra.mxu0 0.0
  %83 = vmatprep.subr.mxu0 0.0
  %84 = vmatpush2.msra.mxu0 0.0
  %85 = vmatprep.subr.mxu0 0.0
  %86 = vmatpush2.msra.mxu0 0.0
  %87 = vmatprep.subr.mxu0 0.0
  %88 = vmatpush2.msra.mxu0 0.0
  %89 = vmatprep.subr.mxu0 0.0
  %90 = vmatpush2.msra.mxu0 0.0
  %91 = vmatprep.subr.mxu0 0.0
  %92 = vmatpush2.msra.mxu0 0.0
  %93 = vmatprep.subr.mxu0 0.0
  %94 = vmatpush2.msra.mxu0 0.0
  %95 = vmatprep.subr.mxu0 0.0
  %96 = vmatpush2.msra.mxu0 0.0
  %97 = vmatprep.subr.mxu0 0.0
  %98 = vmatpush2.msra.mxu0 0.0
  %99 = vmatprep.subr.mxu0 0.0
  %100 = vmatpush2.msra.mxu0 0.0
  %101 = vmatprep.subr.mxu0 0.0
  %102 = vmatpush2.msra.mxu0 0.0
  %103 = vmatprep.subr.mxu0 0.0
  %104 = vmatpush2.msra.mxu0 0.0
  %105 = vmatprep.subr.mxu0 0.0
  %106 = vmatpush2.msra.mxu0 0.0
  %107 = vmatprep.subr.mxu0 0.0
  %108 = vmatpush2.msra.mxu0 0.0
  %109 = vmatprep.subr.mxu0 0.0
  %110 = vmatpush2.msra.mxu0 0.0
  %111 = vmatprep.subr.mxu0 0.0
  %112 = vmatpush2.msra.mxu0 0.0
  %113 = vmatprep.mubr.f32.mxu0 0.0
  %114 = vmatmul.mubr.f32.gmra.mxu0 %v47
  %v115 = vpop.f32.mrf.mxu0
  %v116 = vadd.f32 %v45, %v115
  %v117 = vpop.f32.mrf.mxu0
  %118 = vdwg.mxu0
  %v119 = vtanh.pop %v116
  %v121 = vsel %vm38, %v119, 0
  %123 = vmatprep.subr.mxu0 0.0
  %124 = vmatpush1.msra.mxu0 0.0
  %125 = vmatprep.subr.mxu0 0.0
  %126 = vmatpush1.msra.mxu0 0.0
  %127 = vmatprep.subr.mxu0 0.0
  %128 = vmatpush1.msra.mxu0 0.0
  %129 = vmatprep.subr.mxu0 0.0
  %130 = vmatpush1.msra.mxu0 0.0
  %131 = vmatprep.subr.mxu0 0.0
  %132 = vmatpush1.msra.mxu0 0.0
  %133 = vmatprep.subr.mxu0 0.0
  %134 = vmatpush1.msra.mxu0 0.0
  %135 = vmatprep.subr.mxu0 0.0
  %136 = vmatpush1.msra.mxu0 0.0
  %137 = vmatprep.subr.mxu0 0.0
  %138 = vmatpush1.msra.mxu0 0.0
  %139 = vmatprep.subr.mxu0 0.0
  %140 = vmatpush1.msra.mxu0 0.0
  %141 = vmatprep.subr.mxu0 0.0
  %142 = vmatpush1.msra.mxu0 0.0
  %143 = vmatprep.subr.mxu0 0.0
  %144 = vmatpush1.msra.mxu0 0.0
  %145 = vmatprep.subr.mxu0 0.0
  %146 = vmatpush1.msra.mxu0 0.0
  %147 = vmatprep.subr.mxu0 0.0
  %148 = vmatpush1.msra.mxu0 %v35
  %149 = vmatprep.subr.mxu0 0.0
  %150 = vmatpush1.msra.mxu0 %v34
  %151 = vmatprep.subr.mxu0 0.0
  %152 = vmatpush1.msra.mxu0 %v33
  %153 = vmatprep.subr.mxu0 0.0
  %154 = vmatpush1.msra.mxu0 %v32
  %155 = vmatprep.subr.mxu0 0.0
  %156 = vmatpush2.msra.mxu0 0.0
  %157 = vmatprep.subr.mxu0 0.0
  %158 = vmatpush2.msra.mxu0 0.0
  %159 = vmatprep.subr.mxu0 0.0
  %160 = vmatpush2.msra.mxu0 0.0
  %161 = vmatprep.subr.mxu0 0.0
  %162 = vmatpush2.msra.mxu0 0.0
  %163 = vmatprep.subr.mxu0 0.0
  %164 = vmatpush2.msra.mxu0 0.0
  %165 = vmatprep.subr.mxu0 0.0
  %166 = vmatpush2.msra.mxu0 0.0
  %167 = vmatprep.subr.mxu0 0.0
  %168 = vmatpush2.msra.mxu0 0.0
  %169 = vmatprep.subr.mxu0 0.0
  %170 = vmatpush2.msra.mxu0 0.0
  %171 = vmatprep.subr.mxu0 0.0
  %172 = vmatpush2.msra.mxu0 0.0
  %173 = vmatprep.subr.mxu0 0.0
  %174 = vmatpush2.msra.mxu0 0.0
  %175 = vmatprep.subr.mxu0 0.0
  %176 = vmatpush2.msra.mxu0 0.0
  %177 = vmatprep.subr.mxu0 0.0
  %178 = vmatpush2.msra.mxu0 0.0
  %179 = vmatprep.subr.mxu0 0.0
  %180 = vmatpush2.msra.mxu0 0.0
  %181 = vmatprep.subr.mxu0 0.0
  %182 = vmatpush2.msra.mxu0 0.0
  %183 = vmatprep.subr.mxu0 0.0
  %184 = vmatpush2.msra.mxu0 0.0
  %185 = vmatprep.subr.mxu0 0.0
  %186 = vmatpush2.msra.mxu0 0.0
  %187 = vmatprep.mubr.f32.mxu0 0.0
  %188 = vmatmul.mubr.f32.gmra.mxu0 %v121
  %v189 = vpop.f32.mrf.mxu0
  %v190 = vadd.f32 0.0, %v189
  %v191 = vpop.f32.mrf.mxu0
  %192 = vdwg.mxu0
  %v193 = vadd.f32 %v40, %v190
  %v195 = vlaneseq
  %v196 = vshrl.u32 %v195, 7
  %v197 = vsub.s32 0, %v196
  %v198 = vrot.slane %v36, %v197
  %v200 = vadd.f32 %v193, %v198
  %v201 = vld [vmem:[%s1] sm:$0xff]
  %v202 = vmul.f32 %v201, 0.35355338
  %v203 = vadd.f32 %v200, %v202
  %s204 = scalar_lea.vmem %s7, 8
  %205 = vst.msk [vmem:[%s204] sm:$0xff] %vm38, %v203
  %v206 = vld [vmem:[%s5 + $0x1] sm:$0x1]
  %v207 = vlaneseq
  %v208 = vshrl.u32 %v207, 7
  %v209 = vsub.s32 0, %v208
  %v210 = vrot.slane %v206, %v209
  %v212 = vsel %vm38, %v203, 0
  %214 = vmatprep.subr.mxu0 0.0
  %215 = vmatpush1.msra.mxu0 0.0
  %216 = vmatprep.subr.mxu0 0.0
  %217 = vmatpush1.msra.mxu0 0.0
  %218 = vmatprep.subr.mxu0 0.0
  %219 = vmatpush1.msra.mxu0 0.0
  %220 = vmatprep.subr.mxu0 0.0
  %221 = vmatpush1.msra.mxu0 0.0
  %222 = vmatprep.subr.mxu0 0.0
  %223 = vmatpush1.msra.mxu0 0.0
  %224 = vmatprep.subr.mxu0 0.0
  %225 = vmatpush1.msra.mxu0 0.0
  %226 = vmatprep.subr.mxu0 0.0
  %227 = vmatpush1.msra.mxu0 0.0
  %228 = vmatprep.subr.mxu0 0.0
  %229 = vmatpush1.msra.mxu0 0.0
  %230 = vmatprep.subr.mxu0 0.0
  %231 = vmatpush1.msra.mxu0 0.0
  %232 = vmatprep.subr.mxu0 0.0
  %233 = vmatpush1.msra.mxu0 0.0
  %234 = vmatprep.subr.mxu0 0.0
  %235 = vmatpush1.msra.mxu0 0.0
  %236 = vmatprep.subr.mxu0 0.0
  %237 = vmatpush1.msra.mxu0 0.0
  %238 = vmatprep.subr.mxu0 0.0
  %239 = vmatpush1.msra.mxu0 %v31
  %240 = vmatprep.subr.mxu0 0.0
  %241 = vmatpush1.msra.mxu0 %v30
  %242 = vmatprep.subr.mxu0 0.0
  %243 = vmatpush1.msra.mxu0 %v29
  %244 = vmatprep.subr.mxu0 0.0
  %245 = vmatpush1.msra.mxu0 %v28
  %246 = vmatprep.subr.mxu0 0.0
  %247 = vmatpush2.msra.mxu0 0.0
  %248 = vmatprep.subr.mxu0 0.0
  %249 = vmatpush2.msra.mxu0 0.0
  %250 = vmatprep.subr.mxu0 0.0
  %251 = vmatpush2.msra.mxu0 0.0
  %252 = vmatprep.subr.mxu0 0.0
  %253 = vmatpush2.msra.mxu0 0.0
  %254 = vmatprep.subr.mxu0 0.0
  %255 = vmatpush2.msra.mxu0 0.0
  %256 = vmatprep.subr.mxu0 0.0
  %257 = vmatpush2.msra.mxu0 0.0
  %258 = vmatprep.subr.mxu0 0.0
  %259 = vmatpush2.msra.mxu0 0.0
  %260 = vmatprep.subr.mxu0 0.0
  %261 = vmatpush2.msra.mxu0 0.0
  %262 = vmatprep.subr.mxu0 0.0
  %263 = vmatpush2.msra.mxu0 0.0
  %264 = vmatprep.subr.mxu0 0.0
  %265 = vmatpush2.msra.mxu0 0.0
  %266 = vmatprep.subr.mxu0 0.0
  %267 = vmatpush2.msra.mxu0 0.0
  %268 = vmatprep.subr.mxu0 0.0
  %269 = vmatpush2.msra.mxu0 0.0
  %270 = vmatprep.subr.mxu0 0.0
  %271 = vmatpush2.msra.mxu0 0.0
  %272 = vmatprep.subr.mxu0 0.0
  %273 = vmatpush2.msra.mxu0 0.0
  %274 = vmatprep.subr.mxu0 0.0
  %275 = vmatpush2.msra.mxu0 0.0
  %276 = vmatprep.subr.mxu0 0.0
  %277 = vmatpush2.msra.mxu0 0.0
  %278 = vmatprep.mubr.f32.mxu0 0.0
  %279 = vmatmul.mubr.f32.gmra.mxu0 %v212
  %v280 = vpop.f32.mrf.mxu0
  %v281 = vadd.f32 %v210, %v280
  %v282 = vpop.f32.mrf.mxu0
  %283 = vdwg.mxu0
  %v284 = vtanh.pop %v281
  %v286 = vsel %vm38, %v284, 0
  %288 = vmatprep.subr.mxu0 0.0
  %289 = vmatpush1.msra.mxu0 0.0
  %290 = vmatprep.subr.mxu0 0.0
  %291 = vmatpush1.msra.mxu0 0.0
  %292 = vmatprep.subr.mxu0 0.0
  %293 = vmatpush1.msra.mxu0 0.0
  %294 = vmatprep.subr.mxu0 0.0
  %295 = vmatpush1.msra.mxu0 0.0
  %296 = vmatprep.subr.mxu0 0.0
  %297 = vmatpush1.msra.mxu0 0.0
  %298 = vmatprep.subr.mxu0 0.0
  %299 = vmatpush1.msra.mxu0 0.0
  %300 = vmatprep.subr.mxu0 0.0
  %301 = vmatpush1.msra.mxu0 0.0
  %302 = vmatprep.subr.mxu0 0.0
  %303 = vmatpush1.msra.mxu0 0.0
  %304 = vmatprep.subr.mxu0 0.0
  %305 = vmatpush1.msra.mxu0 0.0
  %306 = vmatprep.subr.mxu0 0.0
  %307 = vmatpush1.msra.mxu0 0.0
  %308 = vmatprep.subr.mxu0 0.0
  %309 = vmatpush1.msra.mxu0 0.0
  %310 = vmatprep.subr.mxu0 0.0
  %311 = vmatpush1.msra.mxu0 0.0
  %312 = vmatprep.subr.mxu0 0.0
  %313 = vmatpush1.msra.mxu0 %v35
  %314 = vmatprep.subr.mxu0 0.0
  %315 = vmatpush1.msra.mxu0 %v34
  %316 = vmatprep.subr.mxu0 0.0
  %317 = vmatpush1.msra.mxu0 %v33
  %318 = vmatprep.subr.mxu0 0.0
  %319 = vmatpush1.msra.mxu0 %v32
  %320 = vmatprep.subr.mxu0 0.0
  %321 = vmatpush2.msra.mxu0 0.0
  %322 = vmatprep.subr.mxu0 0.0
  %323 = vmatpush2.msra.mxu0 0.0
  %324 = vmatprep.subr.mxu0 0.0
  %325 = vmatpush2.msra.mxu0 0.0
  %326 = vmatprep.subr.mxu0 0.0
  %327 = vmatpush2.msra.mxu0 0.0
  %328 = vmatprep.subr.mxu0 0.0
  %329 = vmatpush2.msra.mxu0 0.0
  %330 = vmatprep.subr.mxu0 0.0
  %331 = vmatpush2.msra.mxu0 0.0
  %332 = vmatprep.subr.mxu0 0.0
  %333 = vmatpush2.msra.mxu0 0.0
  %334 = vmatprep.subr.mxu0 0.0
  %335 = vmatpush2.msra.mxu0 0.0
  %336 = vmatprep.subr.mxu0 0.0
  %337 = vmatpush2.msra.mxu0 0.0
  %338 = vmatprep.subr.mxu0 0.0
  %339 = vmatpush2.msra.mxu0 0.0
  %340 = vmatprep.subr.mxu0 0.0
  %341 = vmatpush2.msra.mxu0 0.0
  %342 = vmatprep.subr.mxu0 0.0
  %343 = vmatpush2.msra.mxu0 0.0
  %344 = vmatprep.subr.mxu0 0.0
  %345 = vmatpush2.msra.mxu0 0.0
  %346 = vmatprep.subr.mxu0 0.0
  %347 = vmatpush2.msra.mxu0 0.0
  %348 = vmatprep.subr.mxu0 0.0
  %349 = vmatpush2.msra.mxu0 0.0
  %350 = vmatprep.subr.mxu0 0.0
  %351 = vmatpush2.msra.mxu0 0.0
  %352 = vmatprep.mubr.f32.mxu0 0.0
  %353 = vmatmul.mubr.f32.gmra.mxu0 %v286
  %v354 = vpop.f32.mrf.mxu0
  %v355 = vadd.f32 0.0, %v354
  %v356 = vpop.f32.mrf.mxu0
  %357 = vdwg.mxu0
  %v358 = vadd.f32 %v203, %v355
  %v359 = vadd.f32 %v358, %v198
  %s360 = scalar_lea.vmem %s1, 8
  %v361 = vld [vmem:[%s360] sm:$0xff]
  %v362 = vmul.f32 %v361, 0.35355338
  %v363 = vadd.f32 %v359, %v362
  %s364 = scalar_lea.vmem %s7, 16
  %365 = vst.msk [vmem:[%s364] sm:$0xff] %vm38, %v363
  %v366 = vld [vmem:[%s5 + $0x2] sm:$0x1]
  %v367 = vlaneseq
  %v368 = vshrl.u32 %v367, 7
  %v369 = vsub.s32 0, %v368
  %v370 = vrot.slane %v366, %v369
  %v372 = vsel %vm38, %v363, 0
  %374 = vmatprep.subr.mxu0 0.0
  %375 = vmatpush1.msra.mxu0 0.0
  %376 = vmatprep.subr.mxu0 0.0
  %377 = vmatpush1.msra.mxu0 0.0
  %378 = vmatprep.subr.mxu0 0.0
  %379 = vmatpush1.msra.mxu0 0.0
  %380 = vmatprep.subr.mxu0 0.0
  %381 = vmatpush1.msra.mxu0 0.0
  %382 = vmatprep.subr.mxu0 0.0
  %383 = vmatpush1.msra.mxu0 0.0
  %384 = vmatprep.subr.mxu0 0.0
  %385 = vmatpush1.msra.mxu0 0.0
  %386 = vmatprep.subr.mxu0 0.0
  %387 = vmatpush1.msra.mxu0 0.0
  %388 = vmatprep.subr.mxu0 0.0
  %389 = vmatpush1.msra.mxu0 0.0
  %390 = vmatprep.subr.mxu0 0.0
  %391 = vmatpush1.msra.mxu0 0.0
  %392 = vmatprep.subr.mxu0 0.0
  %393 = vmatpush1.msra.mxu0 0.0
  %394 = vmatprep.subr.mxu0 0.0
  %395 = vmatpush1.msra.mxu0 0.0
  %396 = vmatprep.subr.mxu0 0.0
  %397 = vmatpush1.msra.mxu0 0.0
  %398 = vmatprep.subr.mxu0 0.0
  %399 = vmatpush1.msra.mxu0 %v31
  %400 = vmatprep.subr.mxu0 0.0
  %401 = vmatpush1.msra.mxu0 %v30
  %402 = vmatprep.subr.mxu0 0.0
  %403 = vmatpush1.msra.mxu0 %v29
  %404 = vmatprep.subr.mxu0 0.0
  %405 = vmatpush1.msra.mxu0 %v28
  %406 = vmatprep.subr.mxu0 0.0
  %407 = vmatpush2.msra.mxu0 0.0
  %408 = vmatprep.subr.mxu0 0.0
  %409 = vmatpush2.msra.mxu0 0.0
  %410 = vmatprep.subr.mxu0 0.0
  %411 = vmatpush2.msra.mxu0 0.0
  %412 = vmatprep.subr.mxu0 0.0
  %413 = vmatpush2.msra.mxu0 0.0
  %414 = vmatprep.subr.mxu0 0.0
  %415 = vmatpush2.msra.mxu0 0.0
  %416 = vmatprep.subr.mxu0 0.0
  %417 = vmatpush2.msra.mxu0 0.0
  %418 = vmatprep.subr.mxu0 0.0
  %419 = vmatpush2.msra.mxu0 0.0
  %420 = vmatprep.subr.mxu0 0.0
  %421 = vmatpush2.msra.mxu0 0.0
  %422 = vmatprep.subr.mxu0 0.0
  %423 = vmatpush2.msra.mxu0 0.0
  %424 = vmatprep.subr.mxu0 0.0
  %425 = vmatpush2.msra.mxu0 0.0
  %426 = vmatprep.subr.mxu0 0.0
  %427 = vmatpush2.msra.mxu0 0.0
  %428 = vmatprep.subr.mxu0 0.0
  %429 = vmatpush2.msra.mxu0 0.0
  %430 = vmatprep.subr.mxu0 0.0
  %431 = vmatpush2.msra.mxu0 0.0
  %432 = vmatprep.subr.mxu0 0.0
  %433 = vmatpush2.msra.mxu0 0.0
  %434 = vmatprep.subr.mxu0 0.0
  %435 = vmatpush2.msra.mxu0 0.0
  %436 = vmatprep.subr.mxu0 0.0
  %437 = vmatpush2.msra.mxu0 0.0
  %438 = vmatprep.mubr.f32.mxu0 0.0
  %439 = vmatmul.mubr.f32.gmra.mxu0 %v372
  %v440 = vpop.f32.mrf.mxu0
  %v441 = vadd.f32 %v370, %v440
  %v442 = vpop.f32.mrf.mxu0
  %443 = vdwg.mxu0
  %v444 = vtanh.pop %v441
  %v446 = vsel %vm38, %v444, 0
  %448 = vmatprep.subr.mxu0 0.0
  %449 = vmatpush1.msra.mxu0 0.0
  %450 = vmatprep.subr.mxu0 0.0
  %451 = vmatpush1.msra.mxu0 0.0
  %452 = vmatprep.subr.mxu0 0.0
  %453 = vmatpush1.msra.mxu0 0.0
  %454 = vmatprep.subr.mxu0 0.0
  %455 = vmatpush1.msra.mxu0 0.0
  %456 = vmatprep.subr.mxu0 0.0
  %457 = vmatpush1.msra.mxu0 0.0
  %458 = vmatprep.subr.mxu0 0.0
  %459 = vmatpush1.msra.mxu0 0.0
  %460 = vmatprep.subr.mxu0 0.0
  %461 = vmatpush1.msra.mxu0 0.0
  %462 = vmatprep.subr.mxu0 0.0
  %463 = vmatpush1.msra.mxu0 0.0
  %464 = vmatprep.subr.mxu0 0.0
  %465 = vmatpush1.msra.mxu0 0.0
  %466 = vmatprep.subr.mxu0 0.0
  %467 = vmatpush1.msra.mxu0 0.0
  %468 = vmatprep.subr.mxu0 0.0
  %469 = vmatpush1.msra.mxu0 0.0
  %470 = vmatprep.subr.mxu0 0.0
  %471 = vmatpush1.msra.mxu0 0.0
  %472 = vmatprep.subr.mxu0 0.0
  %473 = vmatpush1.msra.mxu0 %v35
  %474 = vmatprep.subr.mxu0 0.0
  %475 = vmatpush1.msra.mxu0 %v34
  %476 = vmatprep.subr.mxu0 0.0
  %477 = vmatpush1.msra.mxu0 %v33
  %478 = vmatprep.subr.mxu0 0.0
  %479 = vmatpush1.msra.mxu0 %v32
  %480 = vmatprep.subr.mxu0 0.0
  %481 = vmatpush2.msra.mxu0 0.0
  %482 = vmatprep.subr.mxu0 0.0
  %483 = vmatpush2.msra.mxu0 0.0
  %484 = vmatprep.subr.mxu0 0.0
  %485 = vmatpush2.msra.mxu0 0.0
  %486 = vmatprep.subr.mxu0 0.0
  %487 = vmatpush2.msra.mxu0 0.0
  %488 = vmatprep.subr.mxu0 0.0
  %489 = vmatpush2.msra.mxu0 0.0
  %490 = vmatprep.subr.mxu0 0.0
  %491 = vmatpush2.msra.mxu0 0.0
  %492 = vmatprep.subr.mxu0 0.0
  %493 = vmatpush2.msra.mxu0 0.0
  %494 = vmatprep.subr.mxu0 0.0
  %495 = vmatpush2.msra.mxu0 0.0
  %496 = vmatprep.subr.mxu0 0.0
  %497 = vmatpush2.msra.mxu0 0.0
  %498 = vmatprep.subr.mxu0 0.0
  %499 = vmatpush2.msra.mxu0 0.0
  %500 = vmatprep.subr.mxu0 0.0
  %501 = vmatpush2.msra.mxu0 0.0
  %502 = vmatprep.subr.mxu0 0.0
  %503 = vmatpush2.msra.mxu0 0.0
  %504 = vmatprep.subr.mxu0 0.0
  %505 = vmatpush2.msra.mxu0 0.0
  %506 = vmatprep.subr.mxu0 0.0
  %507 = vmatpush2.msra.mxu0 0.0
  %508 = vmatprep.subr.mxu0 0.0
  %509 = vmatpush2.msra.mxu0 0.0
  %510 = vmatprep.subr.mxu0 0.0
  %511 = vmatpush2.msra.mxu0 0.0
  %512 = vmatprep.mubr.f32.mxu0 0.0
  %513 = vmatmul.mubr.f32.gmra.mxu0 %v446
  %v514 = vpop.f32.mrf.mxu0
  %v515 = vadd.f32 0.0, %v514
  %v516 = vpop.f32.mrf.mxu0
  %517 = vdwg.mxu0
  %v518 = vadd.f32 %v363, %v515
  %v519 = vadd.f32 %v518, %v198
  %s520 = scalar_lea.vmem %s1, 16
  %v521 = vld [vmem:[%s520] sm:$0xff]
  %v522 = vmul.f32 %v521, 0.35355338
  %v523 = vadd.f32 %v519, %v522
  %s524 = scalar_lea.vmem %s7, 24
  %525 = vst.msk [vmem:[%s524] sm:$0xff] %vm38, %v523
  %v526 = vld [vmem:[%s5 + $0x3] sm:$0x1]
  %v527 = vlaneseq
  %v528 = vshrl.u32 %v527, 7
  %v529 = vsub.s32 0, %v528
  %v530 = vrot.slane %v526, %v529
  %v532 = vsel %vm38, %v523, 0
  %534 = vmatprep.subr.mxu0 0.0
  %535 = vmatpush1.msra.mxu0 0.0
  %536 = vmatprep.subr.mxu0 0.0
  %537 = vmatpush1.msra.mxu0 0.0
  %538 = vmatprep.subr.mxu0 0.0
  %539 = vmatpush1.msra.mxu0 0.0
  %540 = vmatprep.subr.mxu0 0.0
  %541 = vmatpush1.msra.mxu0 0.0
  %542 = vmatprep.subr.mxu0 0.0
  %543 = vmatpush1.msra.mxu0 0.0
  %544 = vmatprep.subr.mxu0 0.0
  %545 = vmatpush1.msra.mxu0 0.0
  %546 = vmatprep.subr.mxu0 0.0
  %547 = vmatpush1.msra.mxu0 0.0
  %548 = vmatprep.subr.mxu0 0.0
  %549 = vmatpush1.msra.mxu0 0.0
  %550 = vmatprep.subr.mxu0 0.0
  %551 = vmatpush1.msra.mxu0 0.0
  %552 = vmatprep.subr.mxu0 0.0
  %553 = vmatpush1.msra.mxu0 0.0
  %554 = vmatprep.subr.mxu0 0.0
  %555 = vmatpush1.msra.mxu0 0.0
  %556 = vmatprep.subr.mxu0 0.0
  %557 = vmatpush1.msra.mxu0 0.0
  %558 = vmatprep.subr.mxu0 0.0
  %559 = vmatpush1.msra.mxu0 %v31
  %560 = vmatprep.subr.mxu0 0.0
  %561 = vmatpush1.msra.mxu0 %v30
  %562 = vmatprep.subr.mxu0 0.0
  %563 = vmatpush1.msra.mxu0 %v29
  %564 = vmatprep.subr.mxu0 0.0
  %565 = vmatpush1.msra.mxu0 %v28
  %566 = vmatprep.subr.mxu0 0.0
  %567 = vmatpush2.msra.mxu0 0.0
  %568 = vmatprep.subr.mxu0 0.0
  %569 = vmatpush2.msra.mxu0 0.0
  %570 = vmatprep.subr.mxu0 0.0
  %571 = vmatpush2.msra.mxu0 0.0
  %572 = vmatprep.subr.mxu0 0.0
  %573 = vmatpush2.msra.mxu0 0.0
  %574 = vmatprep.subr.mxu0 0.0
  %575 = vmatpush2.msra.mxu0 0.0
  %576 = vmatprep.subr.mxu0 0.0
  %577 = vmatpush2.msra.mxu0 0.0
  %578 = vmatprep.subr.mxu0 0.0
  %579 = vmatpush2.msra.mxu0 0.0
  %580 = vmatprep.subr.mxu0 0.0
  %581 = vmatpush2.msra.mxu0 0.0
  %582 = vmatprep.subr.mxu0 0.0
  %583 = vmatpush2.msra.mxu0 0.0
  %584 = vmatprep.subr.mxu0 0.0
  %585 = vmatpush2.msra.mxu0 0.0
  %586 = vmatprep.subr.mxu0 0.0
  %587 = vmatpush2.msra.mxu0 0.0
  %588 = vmatprep.subr.mxu0 0.0
  %589 = vmatpush2.msra.mxu0 0.0
  %590 = vmatprep.subr.mxu0 0.0
  %591 = vmatpush2.msra.mxu0 0.0
  %592 = vmatprep.subr.mxu0 0.0
  %593 = vmatpush2.msra.mxu0 0.0
  %594 = vmatprep.subr.mxu0 0.0
  %595 = vmatpush2.msra.mxu0 0.0
  %596 = vmatprep.subr.mxu0 0.0
  %597 = vmatpush2.msra.mxu0 0.0
  %598 = vmatprep.mubr.f32.mxu0 0.0
  %599 = vmatmul.mubr.f32.gmra.mxu0 %v532
  %v600 = vpop.f32.mrf.mxu0
  %v601 = vadd.f32 %v530, %v600
  %v602 = vpop.f32.mrf.mxu0
  %603 = vdwg.mxu0
  %v604 = vtanh.pop %v601
  %v606 = vsel %vm38, %v604, 0
  %608 = vmatprep.subr.mxu0 0.0
  %609 = vmatpush1.msra.mxu0 0.0
  %610 = vmatprep.subr.mxu0 0.0
  %611 = vmatpush1.msra.mxu0 0.0
  %612 = vmatprep.subr.mxu0 0.0
  %613 = vmatpush1.msra.mxu0 0.0
  %614 = vmatprep.subr.mxu0 0.0
  %615 = vmatpush1.msra.mxu0 0.0
  %616 = vmatprep.subr.mxu0 0.0
  %617 = vmatpush1.msra.mxu0 0.0
  %618 = vmatprep.subr.mxu0 0.0
  %619 = vmatpush1.msra.mxu0 0.0
  %620 = vmatprep.subr.mxu0 0.0
  %621 = vmatpush1.msra.mxu0 0.0
  %622 = vmatprep.subr.mxu0 0.0
  %623 = vmatpush1.msra.mxu0 0.0
  %624 = vmatprep.subr.mxu0 0.0
  %625 = vmatpush1.msra.mxu0 0.0
  %626 = vmatprep.subr.mxu0 0.0
  %627 = vmatpush1.msra.mxu0 0.0
  %628 = vmatprep.subr.mxu0 0.0
  %629 = vmatpush1.msra.mxu0 0.0
  %630 = vmatprep.subr.mxu0 0.0
  %631 = vmatpush1.msra.mxu0 0.0
  %632 = vmatprep.subr.mxu0 0.0
  %633 = vmatpush1.msra.mxu0 %v35
  %634 = vmatprep.subr.mxu0 0.0
  %635 = vmatpush1.msra.mxu0 %v34
  %636 = vmatprep.subr.mxu0 0.0
  %637 = vmatpush1.msra.mxu0 %v33
  %638 = vmatprep.subr.mxu0 0.0
  %639 = vmatpush1.msra.mxu0 %v32
  %640 = vmatprep.subr.mxu0 0.0
  %641 = vmatpush2.msra.mxu0 0.0
  %642 = vmatprep.subr.mxu0 0.0
  %643 = vmatpush2.msra.mxu0 0.0
  %644 = vmatprep.subr.mxu0 0.0
  %645 = vmatpush2.msra.mxu0 0.0
  %646 = vmatprep.subr.mxu0 0.0
  %647 = vmatpush2.msra.mxu0 0.0
  %648 = vmatprep.subr.mxu0 0.0
  %649 = vmatpush2.msra.mxu0 0.0
  %650 = vmatprep.subr.mxu0 0.0
  %651 = vmatpush2.msra.mxu0 0.0
  %652 = vmatprep.subr.mxu0 0.0
  %653 = vmatpush2.msra.mxu0 0.0
  %654 = vmatprep.subr.mxu0 0.0
  %655 = vmatpush2.msra.mxu0 0.0
  %656 = vmatprep.subr.mxu0 0.0
  %657 = vmatpush2.msra.mxu0 0.0
  %658 = vmatprep.subr.mxu0 0.0
  %659 = vmatpush2.msra.mxu0 0.0
  %660 = vmatprep.subr.mxu0 0.0
  %661 = vmatpush2.msra.mxu0 0.0
  %662 = vmatprep.subr.mxu0 0.0
  %663 = vmatpush2.msra.mxu0 0.0
  %664 = vmatprep.subr.mxu0 0.0
  %665 = vmatpush2.msra.mxu0 0.0
  %666 = vmatprep.subr.mxu0 0.0
  %667 = vmatpush2.msra.mxu0 0.0
  %668 = vmatprep.subr.mxu0 0.0
  %669 = vmatpush2.msra.mxu0 0.0
  %670 = vmatprep.subr.mxu0 0.0
  %671 = vmatpush2.msra.mxu0 0.0
  %672 = vmatprep.mubr.f32.mxu0 0.0
  %673 = vmatmul.mubr.f32.gmra.mxu0 %v606
  %v674 = vpop.f32.mrf.mxu0
  %v675 = vadd.f32 0.0, %v674
  %v676 = vpop.f32.mrf.mxu0
  %677 = vdwg.mxu0
  %v678 = vadd.f32 %v523, %v675
  %v679 = vadd.f32 %v678, %v198
  %s680 = scalar_lea.vmem %s1, 24
  %v681 = vld [vmem:[%s680] sm:$0xff]
  %v682 = vmul.f32 %v681, 0.35355338
  %v683 = vadd.f32 %v679, %v682
  %s684 = scalar_lea.vmem %s7, 32
  %685 = vst.msk [vmem:[%s684] sm:$0xff] %vm38, %v683
  %v686 = vld [vmem:[%s5 + $0x4] sm:$0x1]
  %v687 = vlaneseq
  %v688 = vshrl.u32 %v687, 7
  %v689 = vsub.s32 0, %v688
  %v690 = vrot.slane %v686, %v689
  %v692 = vsel %vm38, %v683, 0
  %694 = vmatprep.subr.mxu0 0.0
  %695 = vmatpush1.msra.mxu0 0.0
  %696 = vmatprep.subr.mxu0 0.0
  %697 = vmatpush1.msra.mxu0 0.0
  %698 = vmatprep.subr.mxu0 0.0
  %699 = vmatpush1.msra.mxu0 0.0
  %700 = vmatprep.subr.mxu0 0.0
  %701 = vmatpush1.msra.mxu0 0.0
  %702 = vmatprep.subr.mxu0 0.0
  %703 = vmatpush1.msra.mxu0 0.0
  %704 = vmatprep.subr.mxu0 0.0
  %705 = vmatpush1.msra.mxu0 0.0
  %706 = vmatprep.subr.mxu0 0.0
  %707 = vmatpush1.msra.mxu0 0.0
  %708 = vmatprep.subr.mxu0 0.0
  %709 = vmatpush1.msra.mxu0 0.0
  %710 = vmatprep.subr.mxu0 0.0
  %711 = vmatpush1.msra.mxu0 0.0
  %712 = vmatprep.subr.mxu0 0.0
  %713 = vmatpush1.msra.mxu0 0.0
  %714 = vmatprep.subr.mxu0 0.0
  %715 = vmatpush1.msra.mxu0 0.0
  %716 = vmatprep.subr.mxu0 0.0
  %717 = vmatpush1.msra.mxu0 0.0
  %718 = vmatprep.subr.mxu0 0.0
  %719 = vmatpush1.msra.mxu0 %v31
  %720 = vmatprep.subr.mxu0 0.0
  %721 = vmatpush1.msra.mxu0 %v30
  %722 = vmatprep.subr.mxu0 0.0
  %723 = vmatpush1.msra.mxu0 %v29
  %724 = vmatprep.subr.mxu0 0.0
  %725 = vmatpush1.msra.mxu0 %v28
  %726 = vmatprep.subr.mxu0 0.0
  %727 = vmatpush2.msra.mxu0 0.0
  %728 = vmatprep.subr.mxu0 0.0
  %729 = vmatpush2.msra.mxu0 0.0
  %730 = vmatprep.subr.mxu0 0.0
  %731 = vmatpush2.msra.mxu0 0.0
  %732 = vmatprep.subr.mxu0 0.0
  %733 = vmatpush2.msra.mxu0 0.0
  %734 = vmatprep.subr.mxu0 0.0
  %735 = vmatpush2.msra.mxu0 0.0
  %736 = vmatprep.subr.mxu0 0.0
  %737 = vmatpush2.msra.mxu0 0.0
  %738 = vmatprep.subr.mxu0 0.0
  %739 = vmatpush2.msra.mxu0 0.0
  %740 = vmatprep.subr.mxu0 0.0
  %741 = vmatpush2.msra.mxu0 0.0
  %742 = vmatprep.subr.mxu0 0.0
  %743 = vmatpush2.msra.mxu0 0.0
  %744 = vmatprep.subr.mxu0 0.0
  %745 = vmatpush2.msra.mxu0 0.0
  %746 = vmatprep.subr.mxu0 0.0
  %747 = vmatpush2.msra.mxu0 0.0
  %748 = vmatprep.subr.mxu0 0.0
  %749 = vmatpush2.msra.mxu0 0.0
  %750 = vmatprep.subr.mxu0 0.0
  %751 = vmatpush2.msra.mxu0 0.0
  %752 = vmatprep.subr.mxu0 0.0
  %753 = vmatpush2.msra.mxu0 0.0
  %754 = vmatprep.subr.mxu0 0.0
  %755 = vmatpush2.msra.mxu0 0.0
  %756 = vmatprep.subr.mxu0 0.0
  %757 = vmatpush2.msra.mxu0 0.0
  %758 = vmatprep.mubr.f32.mxu0 0.0
  %759 = vmatmul.mubr.f32.gmra.mxu0 %v692
  %v760 = vpop.f32.mrf.mxu0
  %v761 = vadd.f32 %v690, %v760
  %v762 = vpop.f32.mrf.mxu0
  %763 = vdwg.mxu0
  %v764 = vtanh.pop %v761
  %v766 = vsel %vm38, %v764, 0
  %768 = vmatprep.subr.mxu0 0.0
  %769 = vmatpush1.msra.mxu0 0.0
  %770 = vmatprep.subr.mxu0 0.0
  %771 = vmatpush1.msra.mxu0 0.0
  %772 = vmatprep.subr.mxu0 0.0
  %773 = vmatpush1.msra.mxu0 0.0
  %774 = vmatprep.subr.mxu0 0.0
  %775 = vmatpush1.msra.mxu0 0.0
  %776 = vmatprep.subr.mxu0 0.0
  %777 = vmatpush1.msra.mxu0 0.0
  %778 = vmatprep.subr.mxu0 0.0
  %779 = vmatpush1.msra.mxu0 0.0
  %780 = vmatprep.subr.mxu0 0.0
  %781 = vmatpush1.msra.mxu0 0.0
  %782 = vmatprep.subr.mxu0 0.0
  %783 = vmatpush1.msra.mxu0 0.0
  %784 = vmatprep.subr.mxu0 0.0
  %785 = vmatpush1.msra.mxu0 0.0
  %786 = vmatprep.subr.mxu0 0.0
  %787 = vmatpush1.msra.mxu0 0.0
  %788 = vmatprep.subr.mxu0 0.0
  %789 = vmatpush1.msra.mxu0 0.0
  %790 = vmatprep.subr.mxu0 0.0
  %791 = vmatpush1.msra.mxu0 0.0
  %792 = vmatprep.subr.mxu0 0.0
  %793 = vmatpush1.msra.mxu0 %v35
  %794 = vmatprep.subr.mxu0 0.0
  %795 = vmatpush1.msra.mxu0 %v34
  %796 = vmatprep.subr.mxu0 0.0
  %797 = vmatpush1.msra.mxu0 %v33
  %798 = vmatprep.subr.mxu0 0.0
  %799 = vmatpush1.msra.mxu0 %v32
  %800 = vmatprep.subr.mxu0 0.0
  %801 = vmatpush2.msra.mxu0 0.0
  %802 = vmatprep.subr.mxu0 0.0
  %803 = vmatpush2.msra.mxu0 0.0
  %804 = vmatprep.subr.mxu0 0.0
  %805 = vmatpush2.msra.mxu0 0.0
  %806 = vmatprep.subr.mxu0 0.0
  %807 = vmatpush2.msra.mxu0 0.0
  %808 = vmatprep.subr.mxu0 0.0
  %809 = vmatpush2.msra.mxu0 0.0
  %810 = vmatprep.subr.mxu0 0.0
  %811 = vmatpush2.msra.mxu0 0.0
  %812 = vmatprep.subr.mxu0 0.0
  %813 = vmatpush2.msra.mxu0 0.0
  %814 = vmatprep.subr.mxu0 0.0
  %815 = vmatpush2.msra.mxu0 0.0
  %816 = vmatprep.subr.mxu0 0.0
  %817 = vmatpush2.msra.mxu0 0.0
  %818 = vmatprep.subr.mxu0 0.0
  %819 = vmatpush2.msra.mxu0 0.0
  %820 = vmatprep.subr.mxu0 0.0
  %821 = vmatpush2.msra.mxu0 0.0
  %822 = vmatprep.subr.mxu0 0.0
  %823 = vmatpush2.msra.mxu0 0.0
  %824 = vmatprep.subr.mxu0 0.0
  %825 = vmatpush2.msra.mxu0 0.0
  %826 = vmatprep.subr.mxu0 0.0
  %827 = vmatpush2.msra.mxu0 0.0
  %828 = vmatprep.subr.mxu0 0.0
  %829 = vmatpush2.msra.mxu0 0.0
  %830 = vmatprep.subr.mxu0 0.0
  %831 = vmatpush2.msra.mxu0 0.0
  %832 = vmatprep.mubr.f32.mxu0 0.0
  %833 = vmatmul.mubr.f32.gmra.mxu0 %v766
  %v834 = vpop.f32.mrf.mxu0
  %v835 = vadd.f32 0.0, %v834
  %v836 = vpop.f32.mrf.mxu0
  %837 = vdwg.mxu0
  %v838 = vadd.f32 %v683, %v835
  %v839 = vadd.f32 %v838, %v198
  %s840 = scalar_lea.vmem %s1, 32
  %v841 = vld [vmem:[%s840] sm:$0xff]
  %v842 = vmul.f32 %v841, 0.35355338
  %v843 = vadd.f32 %v839, %v842
  %s844 = scalar_lea.vmem %s7, 40
  %845 = vst.msk [vmem:[%s844] sm:$0xff] %vm38, %v843
  %v846 = vld [vmem:[%s5 + $0x5] sm:$0x1]
  %v847 = vlaneseq
  %v848 = vshrl.u32 %v847, 7
  %v849 = vsub.s32 0, %v848
  %v850 = vrot.slane %v846, %v849
  %v852 = vsel %vm38, %v843, 0
  %854 = vmatprep.subr.mxu0 0.0
  %855 = vmatpush1.msra.mxu0 0.0
  %856 = vmatprep.subr.mxu0 0.0
  %857 = vmatpush1.msra.mxu0 0.0
  %858 = vmatprep.subr.mxu0 0.0
  %859 = vmatpush1.msra.mxu0 0.0
  %860 = vmatprep.subr.mxu0 0.0
  %861 = vmatpush1.msra.mxu0 0.0
  %862 = vmatprep.subr.mxu0 0.0
  %863 = vmatpush1.msra.mxu0 0.0
  %864 = vmatprep.subr.mxu0 0.0
  %865 = vmatpush1.msra.mxu0 0.0
  %866 = vmatprep.subr.mxu0 0.0
  %867 = vmatpush1.msra.mxu0 0.0
  %868 = vmatprep.subr.mxu0 0.0
  %869 = vmatpush1.msra.mxu0 0.0
  %870 = vmatprep.subr.mxu0 0.0
  %871 = vmatpush1.msra.mxu0 0.0
  %872 = vmatprep.subr.mxu0 0.0
  %873 = vmatpush1.msra.mxu0 0.0
  %874 = vmatprep.subr.mxu0 0.0
  %875 = vmatpush1.msra.mxu0 0.0
  %876 = vmatprep.subr.mxu0 0.0
  %877 = vmatpush1.msra.mxu0 0.0
  %878 = vmatprep.subr.mxu0 0.0
  %879 = vmatpush1.msra.mxu0 %v31
  %880 = vmatprep.subr.mxu0 0.0
  %881 = vmatpush1.msra.mxu0 %v30
  %882 = vmatprep.subr.mxu0 0.0
  %883 = vmatpush1.msra.mxu0 %v29
  %884 = vmatprep.subr.mxu0 0.0
  %885 = vmatpush1.msra.mxu0 %v28
  %886 = vmatprep.subr.mxu0 0.0
  %887 = vmatpush2.msra.mxu0 0.0
  %888 = vmatprep.subr.mxu0 0.0
  %889 = vmatpush2.msra.mxu0 0.0
  %890 = vmatprep.subr.mxu0 0.0
  %891 = vmatpush2.msra.mxu0 0.0
  %892 = vmatprep.subr.mxu0 0.0
  %893 = vmatpush2.msra.mxu0 0.0
  %894 = vmatprep.subr.mxu0 0.0
  %895 = vmatpush2.msra.mxu0 0.0
  %896 = vmatprep.subr.mxu0 0.0
  %897 = vmatpush2.msra.mxu0 0.0
  %898 = vmatprep.subr.mxu0 0.0
  %899 = vmatpush2.msra.mxu0 0.0
  %900 = vmatprep.subr.mxu0 0.0
  %901 = vmatpush2.msra.mxu0 0.0
  %902 = vmatprep.subr.mxu0 0.0
  %903 = vmatpush2.msra.mxu0 0.0
  %904 = vmatprep.subr.mxu0 0.0
  %905 = vmatpush2.msra.mxu0 0.0
  %906 = vmatprep.subr.mxu0 0.0
  %907 = vmatpush2.msra.mxu0 0.0
  %908 = vmatprep.subr.mxu0 0.0
  %909 = vmatpush2.msra.mxu0 0.0
  %910 = vmatprep.subr.mxu0 0.0
  %911 = vmatpush2.msra.mxu0 0.0
  %912 = vmatprep.subr.mxu0 0.0
  %913 = vmatpush2.msra.mxu0 0.0
  %914 = vmatprep.subr.mxu0 0.0
  %915 = vmatpush2.msra.mxu0 0.0
  %916 = vmatprep.subr.mxu0 0.0
  %917 = vmatpush2.msra.mxu0 0.0
  %918 = vmatprep.mubr.f32.mxu0 0.0
  %919 = vmatmul.mubr.f32.gmra.mxu0 %v852
  %v920 = vpop.f32.mrf.mxu0
  %v921 = vadd.f32 %v850, %v920
  %v922 = vpop.f32.mrf.mxu0
  %923 = vdwg.mxu0
  %v924 = vtanh.pop %v921
  %v926 = vsel %vm38, %v924, 0
  %928 = vmatprep.subr.mxu0 0.0
  %929 = vmatpush1.msra.mxu0 0.0
  %930 = vmatprep.subr.mxu0 0.0
  %931 = vmatpush1.msra.mxu0 0.0
  %932 = vmatprep.subr.mxu0 0.0
  %933 = vmatpush1.msra.mxu0 0.0
  %934 = vmatprep.subr.mxu0 0.0
  %935 = vmatpush1.msra.mxu0 0.0
  %936 = vmatprep.subr.mxu0 0.0
  %937 = vmatpush1.msra.mxu0 0.0
  %938 = vmatprep.subr.mxu0 0.0
  %939 = vmatpush1.msra.mxu0 0.0
  %940 = vmatprep.subr.mxu0 0.0
  %941 = vmatpush1.msra.mxu0 0.0
  %942 = vmatprep.subr.mxu0 0.0
  %943 = vmatpush1.msra.mxu0 0.0
  %944 = vmatprep.subr.mxu0 0.0
  %945 = vmatpush1.msra.mxu0 0.0
  %946 = vmatprep.subr.mxu0 0.0
  %947 = vmatpush1.msra.mxu0 0.0
  %948 = vmatprep.subr.mxu0 0.0
  %949 = vmatpush1.msra.mxu0 0.0
  %950 = vmatprep.subr.mxu0 0.0
  %951 = vmatpush1.msra.mxu0 0.0
  %952 = vmatprep.subr.mxu0 0.0
  %953 = vmatpush1.msra.mxu0 %v35
  %954 = vmatprep.subr.mxu0 0.0
  %955 = vmatpush1.msra.mxu0 %v34
  %956 = vmatprep.subr.mxu0 0.0
  %957 = vmatpush1.msra.mxu0 %v33
  %958 = vmatprep.subr.mxu0 0.0
  %959 = vmatpush1.msra.mxu0 %v32
  %960 = vmatprep.subr.mxu0 0.0
  %961 = vmatpush2.msra.mxu0 0.0
  %962 = vmatprep.subr.mxu0 0.0
  %963 = vmatpush2.msra.mxu0 0.0
  %964 = vmatprep.subr.mxu0 0.0
  %965 = vmatpush2.msra.mxu0 0.0
  %966 = vmatprep.subr.mxu0 0.0
  %967 = vmatpush2.msra.mxu0 0.0
  %968 = vmatprep.subr.mxu0 0.0
  %969 = vmatpush2.msra.mxu0 0.0
  %970 = vmatprep.subr.mxu0 0.0
  %971 = vmatpush2.msra.mxu0 0.0
  %972 = vmatprep.subr.mxu0 0.0
  %973 = vmatpush2.msra.mxu0 0.0
  %974 = vmatprep.subr.mxu0 0.0
  %975 = vmatpush2.msra.mxu0 0.0
  %976 = vmatprep.subr.mxu0 0.0
  %977 = vmatpush2.msra.mxu0 0.0
  %978 = vmatprep.subr.mxu0 0.0
  %979 = vmatpush2.msra.mxu0 0.0
  %980 = vmatprep.subr.mxu0 0.0
  %981 = vmatpush2.msra.mxu0 0.0
  %982 = vmatprep.subr.mxu0 0.0
  %983 = vmatpush2.msra.mxu0 0.0
  %984 = vmatprep.subr.mxu0 0.0
  %985 = vmatpush2.msra.mxu0 0.0
  %986 = vmatprep.subr.mxu0 0.0
  %987 = vmatpush2.msra.mxu0 0.0
  %988 = vmatprep.subr.mxu0 0.0
  %989 = vmatpush2.msra.mxu0 0.0
  %990 = vmatprep.subr.mxu0 0.0
  %991 = vmatpush2.msra.mxu0 0.0
  %992 = vmatprep.mubr.f32.mxu0 0.0
  %993 = vmatmul.mubr.f32.gmra.mxu0 %v926
  %v994 = vpop.f32.mrf.mxu0
  %v995 = vadd.f32 0.0, %v994
  %v996 = vpop.f32.mrf.mxu0
  %997 = vdwg.mxu0
  %v998 = vadd.f32 %v843, %v995
  %v999 = vadd.f32 %v998, %v198
  %s1000 = scalar_lea.vmem %s1, 40
  %v1001 = vld [vmem:[%s1000] sm:$0xff]
  %v1002 = vmul.f32 %v1001, 0.35355338
  %v1003 = vadd.f32 %v999, %v1002
  %s1004 = scalar_lea.vmem %s7, 48
  %1005 = vst.msk [vmem:[%s1004] sm:$0xff] %vm38, %v1003
  %v1006 = vld [vmem:[%s5 + $0x6] sm:$0x1]
  %v1007 = vlaneseq
  %v1008 = vshrl.u32 %v1007, 7
  %v1009 = vsub.s32 0, %v1008
  %v1010 = vrot.slane %v1006, %v1009
  %v1012 = vsel %vm38, %v1003, 0
  %1014 = vmatprep.subr.mxu0 0.0
  %1015 = vmatpush1.msra.mxu0 0.0
  %1016 = vmatprep.subr.mxu0 0.0
  %1017 = vmatpush1.msra.mxu0 0.0
  %1018 = vmatprep.subr.mxu0 0.0
  %1019 = vmatpush1.msra.mxu0 0.0
  %1020 = vmatprep.subr.mxu0 0.0
  %1021 = vmatpush1.msra.mxu0 0.0
  %1022 = vmatprep.subr.mxu0 0.0
  %1023 = vmatpush1.msra.mxu0 0.0
  %1024 = vmatprep.subr.mxu0 0.0
  %1025 = vmatpush1.msra.mxu0 0.0
  %1026 = vmatprep.subr.mxu0 0.0
  %1027 = vmatpush1.msra.mxu0 0.0
  %1028 = vmatprep.subr.mxu0 0.0
  %1029 = vmatpush1.msra.mxu0 0.0
  %1030 = vmatprep.subr.mxu0 0.0
  %1031 = vmatpush1.msra.mxu0 0.0
  %1032 = vmatprep.subr.mxu0 0.0
  %1033 = vmatpush1.msra.mxu0 0.0
  %1034 = vmatprep.subr.mxu0 0.0
  %1035 = vmatpush1.msra.mxu0 0.0
  %1036 = vmatprep.subr.mxu0 0.0
  %1037 = vmatpush1.msra.mxu0 0.0
  %1038 = vmatprep.subr.mxu0 0.0
  %1039 = vmatpush1.msra.mxu0 %v31
  %1040 = vmatprep.subr.mxu0 0.0
  %1041 = vmatpush1.msra.mxu0 %v30
  %1042 = vmatprep.subr.mxu0 0.0
  %1043 = vmatpush1.msra.mxu0 %v29
  %1044 = vmatprep.subr.mxu0 0.0
  %1045 = vmatpush1.msra.mxu0 %v28
  %1046 = vmatprep.subr.mxu0 0.0
  %1047 = vmatpush2.msra.mxu0 0.0
  %1048 = vmatprep.subr.mxu0 0.0
  %1049 = vmatpush2.msra.mxu0 0.0
  %1050 = vmatprep.subr.mxu0 0.0
  %1051 = vmatpush2.msra.mxu0 0.0
  %1052 = vmatprep.subr.mxu0 0.0
  %1053 = vmatpush2.msra.mxu0 0.0
  %1054 = vmatprep.subr.mxu0 0.0
  %1055 = vmatpush2.msra.mxu0 0.0
  %1056 = vmatprep.subr.mxu0 0.0
  %1057 = vmatpush2.msra.mxu0 0.0
  %1058 = vmatprep.subr.mxu0 0.0
  %1059 = vmatpush2.msra.mxu0 0.0
  %1060 = vmatprep.subr.mxu0 0.0
  %1061 = vmatpush2.msra.mxu0 0.0
  %1062 = vmatprep.subr.mxu0 0.0
  %1063 = vmatpush2.msra.mxu0 0.0
  %1064 = vmatprep.subr.mxu0 0.0
  %1065 = vmatpush2.msra.mxu0 0.0
  %1066 = vmatprep.subr.mxu0 0.0
  %1067 = vmatpush2.msra.mxu0 0.0
  %1068 = vmatprep.subr.mxu0 0.0
  %1069 = vmatpush2.msra.mxu0 0.0
  %1070 = vmatprep.subr.mxu0 0.0
  %1071 = vmatpush2.msra.mxu0 0.0
  %1072 = vmatprep.subr.mxu0 0.0
  %1073 = vmatpush2.msra.mxu0 0.0
  %1074 = vmatprep.subr.mxu0 0.0
  %1075 = vmatpush2.msra.mxu0 0.0
  %1076 = vmatprep.subr.mxu0 0.0
  %1077 = vmatpush2.msra.mxu0 0.0
  %1078 = vmatprep.mubr.f32.mxu0 0.0
  %1079 = vmatmul.mubr.f32.gmra.mxu0 %v1012
  %v1080 = vpop.f32.mrf.mxu0
  %v1081 = vadd.f32 %v1010, %v1080
  %v1082 = vpop.f32.mrf.mxu0
  %1083 = vdwg.mxu0
  %v1084 = vtanh.pop %v1081
  %v1086 = vsel %vm38, %v1084, 0
  %1088 = vmatprep.subr.mxu0 0.0
  %1089 = vmatpush1.msra.mxu0 0.0
  %1090 = vmatprep.subr.mxu0 0.0
  %1091 = vmatpush1.msra.mxu0 0.0
  %1092 = vmatprep.subr.mxu0 0.0
  %1093 = vmatpush1.msra.mxu0 0.0
  %1094 = vmatprep.subr.mxu0 0.0
  %1095 = vmatpush1.msra.mxu0 0.0
  %1096 = vmatprep.subr.mxu0 0.0
  %1097 = vmatpush1.msra.mxu0 0.0
  %1098 = vmatprep.subr.mxu0 0.0
  %1099 = vmatpush1.msra.mxu0 0.0
  %1100 = vmatprep.subr.mxu0 0.0
  %1101 = vmatpush1.msra.mxu0 0.0
  %1102 = vmatprep.subr.mxu0 0.0
  %1103 = vmatpush1.msra.mxu0 0.0
  %1104 = vmatprep.subr.mxu0 0.0
  %1105 = vmatpush1.msra.mxu0 0.0
  %1106 = vmatprep.subr.mxu0 0.0
  %1107 = vmatpush1.msra.mxu0 0.0
  %1108 = vmatprep.subr.mxu0 0.0
  %1109 = vmatpush1.msra.mxu0 0.0
  %1110 = vmatprep.subr.mxu0 0.0
  %1111 = vmatpush1.msra.mxu0 0.0
  %1112 = vmatprep.subr.mxu0 0.0
  %1113 = vmatpush1.msra.mxu0 %v35
  %1114 = vmatprep.subr.mxu0 0.0
  %1115 = vmatpush1.msra.mxu0 %v34
  %1116 = vmatprep.subr.mxu0 0.0
  %1117 = vmatpush1.msra.mxu0 %v33
  %1118 = vmatprep.subr.mxu0 0.0
  %1119 = vmatpush1.msra.mxu0 %v32
  %1120 = vmatprep.subr.mxu0 0.0
  %1121 = vmatpush2.msra.mxu0 0.0
  %1122 = vmatprep.subr.mxu0 0.0
  %1123 = vmatpush2.msra.mxu0 0.0
  %1124 = vmatprep.subr.mxu0 0.0
  %1125 = vmatpush2.msra.mxu0 0.0
  %1126 = vmatprep.subr.mxu0 0.0
  %1127 = vmatpush2.msra.mxu0 0.0
  %1128 = vmatprep.subr.mxu0 0.0
  %1129 = vmatpush2.msra.mxu0 0.0
  %1130 = vmatprep.subr.mxu0 0.0
  %1131 = vmatpush2.msra.mxu0 0.0
  %1132 = vmatprep.subr.mxu0 0.0
  %1133 = vmatpush2.msra.mxu0 0.0
  %1134 = vmatprep.subr.mxu0 0.0
  %1135 = vmatpush2.msra.mxu0 0.0
  %1136 = vmatprep.subr.mxu0 0.0
  %1137 = vmatpush2.msra.mxu0 0.0
  %1138 = vmatprep.subr.mxu0 0.0
  %1139 = vmatpush2.msra.mxu0 0.0
  %1140 = vmatprep.subr.mxu0 0.0
  %1141 = vmatpush2.msra.mxu0 0.0
  %1142 = vmatprep.subr.mxu0 0.0
  %1143 = vmatpush2.msra.mxu0 0.0
  %1144 = vmatprep.subr.mxu0 0.0
  %1145 = vmatpush2.msra.mxu0 0.0
  %1146 = vmatprep.subr.mxu0 0.0
  %1147 = vmatpush2.msra.mxu0 0.0
  %1148 = vmatprep.subr.mxu0 0.0
  %1149 = vmatpush2.msra.mxu0 0.0
  %1150 = vmatprep.subr.mxu0 0.0
  %1151 = vmatpush2.msra.mxu0 0.0
  %1152 = vmatprep.mubr.f32.mxu0 0.0
  %1153 = vmatmul.mubr.f32.gmra.mxu0 %v1086
  %v1154 = vpop.f32.mrf.mxu0
  %v1155 = vadd.f32 0.0, %v1154
  %v1156 = vpop.f32.mrf.mxu0
  %1157 = vdwg.mxu0
  %v1158 = vadd.f32 %v1003, %v1155
  %v1159 = vadd.f32 %v1158, %v198
  %s1160 = scalar_lea.vmem %s1, 48
  %v1161 = vld [vmem:[%s1160] sm:$0xff]
  %v1162 = vmul.f32 %v1161, 0.35355338
  %v1163 = vadd.f32 %v1159, %v1162
  %s1164 = scalar_lea.vmem %s7, 56
  %1165 = vst.msk [vmem:[%s1164] sm:$0xff] %vm38, %v1163
  %v1166 = vld [vmem:[%s5 + $0x7] sm:$0x1]
  %v1167 = vlaneseq
  %v1168 = vshrl.u32 %v1167, 7
  %v1169 = vsub.s32 0, %v1168
  %v1170 = vrot.slane %v1166, %v1169
  %v1172 = vsel %vm38, %v1163, 0
  %1174 = vmatprep.subr.mxu0 0.0
  %1175 = vmatpush1.msra.mxu0 0.0
  %1176 = vmatprep.subr.mxu0 0.0
  %1177 = vmatpush1.msra.mxu0 0.0
  %1178 = vmatprep.subr.mxu0 0.0
  %1179 = vmatpush1.msra.mxu0 0.0
  %1180 = vmatprep.subr.mxu0 0.0
  %1181 = vmatpush1.msra.mxu0 0.0
  %1182 = vmatprep.subr.mxu0 0.0
  %1183 = vmatpush1.msra.mxu0 0.0
  %1184 = vmatprep.subr.mxu0 0.0
  %1185 = vmatpush1.msra.mxu0 0.0
  %1186 = vmatprep.subr.mxu0 0.0
  %1187 = vmatpush1.msra.mxu0 0.0
  %1188 = vmatprep.subr.mxu0 0.0
  %1189 = vmatpush1.msra.mxu0 0.0
  %1190 = vmatprep.subr.mxu0 0.0
  %1191 = vmatpush1.msra.mxu0 0.0
  %1192 = vmatprep.subr.mxu0 0.0
  %1193 = vmatpush1.msra.mxu0 0.0
  %1194 = vmatprep.subr.mxu0 0.0
  %1195 = vmatpush1.msra.mxu0 0.0
  %1196 = vmatprep.subr.mxu0 0.0
  %1197 = vmatpush1.msra.mxu0 0.0
  %1198 = vmatprep.subr.mxu0 0.0
  %1199 = vmatpush1.msra.mxu0 %v31
  %1200 = vmatprep.subr.mxu0 0.0
  %1201 = vmatpush1.msra.mxu0 %v30
  %1202 = vmatprep.subr.mxu0 0.0
  %1203 = vmatpush1.msra.mxu0 %v29
  %1204 = vmatprep.subr.mxu0 0.0
  %1205 = vmatpush1.msra.mxu0 %v28
  %1206 = vmatprep.subr.mxu0 0.0
  %1207 = vmatpush2.msra.mxu0 0.0
  %1208 = vmatprep.subr.mxu0 0.0
  %1209 = vmatpush2.msra.mxu0 0.0
  %1210 = vmatprep.subr.mxu0 0.0
  %1211 = vmatpush2.msra.mxu0 0.0
  %1212 = vmatprep.subr.mxu0 0.0
  %1213 = vmatpush2.msra.mxu0 0.0
  %1214 = vmatprep.subr.mxu0 0.0
  %1215 = vmatpush2.msra.mxu0 0.0
  %1216 = vmatprep.subr.mxu0 0.0
  %1217 = vmatpush2.msra.mxu0 0.0
  %1218 = vmatprep.subr.mxu0 0.0
  %1219 = vmatpush2.msra.mxu0 0.0
  %1220 = vmatprep.subr.mxu0 0.0
  %1221 = vmatpush2.msra.mxu0 0.0
  %1222 = vmatprep.subr.mxu0 0.0
  %1223 = vmatpush2.msra.mxu0 0.0
  %1224 = vmatprep.subr.mxu0 0.0
  %1225 = vmatpush2.msra.mxu0 0.0
  %1226 = vmatprep.subr.mxu0 0.0
  %1227 = vmatpush2.msra.mxu0 0.0
  %1228 = vmatprep.subr.mxu0 0.0
  %1229 = vmatpush2.msra.mxu0 0.0
  %1230 = vmatprep.subr.mxu0 0.0
  %1231 = vmatpush2.msra.mxu0 0.0
  %1232 = vmatprep.subr.mxu0 0.0
  %1233 = vmatpush2.msra.mxu0 0.0
  %1234 = vmatprep.subr.mxu0 0.0
  %1235 = vmatpush2.msra.mxu0 0.0
  %1236 = vmatprep.subr.mxu0 0.0
  %1237 = vmatpush2.msra.mxu0 0.0
  %1238 = vmatprep.mubr.f32.mxu0 0.0
  %1239 = vmatmul.mubr.f32.gmra.mxu0 %v1172
  %v1240 = vpop.f32.mrf.mxu0
  %v1241 = vadd.f32 %v1170, %v1240
  %v1242 = vpop.f32.mrf.mxu0
  %1243 = vdwg.mxu0
  %v1244 = vtanh.pop %v1241
  %v1246 = vsel %vm38, %v1244, 0
  %1248 = vmatprep.subr.mxu0 0.0
  %1249 = vmatpush1.msra.mxu0 0.0
  %1250 = vmatprep.subr.mxu0 0.0
  %1251 = vmatpush1.msra.mxu0 0.0
  %1252 = vmatprep.subr.mxu0 0.0
  %1253 = vmatpush1.msra.mxu0 0.0
  %1254 = vmatprep.subr.mxu0 0.0
  %1255 = vmatpush1.msra.mxu0 0.0
  %1256 = vmatprep.subr.mxu0 0.0
  %1257 = vmatpush1.msra.mxu0 0.0
  %1258 = vmatprep.subr.mxu0 0.0
  %1259 = vmatpush1.msra.mxu0 0.0
  %1260 = vmatprep.subr.mxu0 0.0
  %1261 = vmatpush1.msra.mxu0 0.0
  %1262 = vmatprep.subr.mxu0 0.0
  %1263 = vmatpush1.msra.mxu0 0.0
  %1264 = vmatprep.subr.mxu0 0.0
  %1265 = vmatpush1.msra.mxu0 0.0
  %1266 = vmatprep.subr.mxu0 0.0
  %1267 = vmatpush1.msra.mxu0 0.0
  %1268 = vmatprep.subr.mxu0 0.0
  %1269 = vmatpush1.msra.mxu0 0.0
  %1270 = vmatprep.subr.mxu0 0.0
  %1271 = vmatpush1.msra.mxu0 0.0
  %1272 = vmatprep.subr.mxu0 0.0
  %1273 = vmatpush1.msra.mxu0 %v35
  %1274 = vmatprep.subr.mxu0 0.0
  %1275 = vmatpush1.msra.mxu0 %v34
  %1276 = vmatprep.subr.mxu0 0.0
  %1277 = vmatpush1.msra.mxu0 %v33
  %1278 = vmatprep.subr.mxu0 0.0
  %1279 = vmatpush1.msra.mxu0 %v32
  %1280 = vmatprep.subr.mxu0 0.0
  %1281 = vmatpush2.msra.mxu0 0.0
  %1282 = vmatprep.subr.mxu0 0.0
  %1283 = vmatpush2.msra.mxu0 0.0
  %1284 = vmatprep.subr.mxu0 0.0
  %1285 = vmatpush2.msra.mxu0 0.0
  %1286 = vmatprep.subr.mxu0 0.0
  %1287 = vmatpush2.msra.mxu0 0.0
  %1288 = vmatprep.subr.mxu0 0.0
  %1289 = vmatpush2.msra.mxu0 0.0
  %1290 = vmatprep.subr.mxu0 0.0
  %1291 = vmatpush2.msra.mxu0 0.0
  %1292 = vmatprep.subr.mxu0 0.0
  %1293 = vmatpush2.msra.mxu0 0.0
  %1294 = vmatprep.subr.mxu0 0.0
  %1295 = vmatpush2.msra.mxu0 0.0
  %1296 = vmatprep.subr.mxu0 0.0
  %1297 = vmatpush2.msra.mxu0 0.0
  %1298 = vmatprep.subr.mxu0 0.0
  %1299 = vmatpush2.msra.mxu0 0.0
  %1300 = vmatprep.subr.mxu0 0.0
  %1301 = vmatpush2.msra.mxu0 0.0
  %1302 = vmatprep.subr.mxu0 0.0
  %1303 = vmatpush2.msra.mxu0 0.0
  %1304 = vmatprep.subr.mxu0 0.0
  %1305 = vmatpush2.msra.mxu0 0.0
  %1306 = vmatprep.subr.mxu0 0.0
  %1307 = vmatpush2.msra.mxu0 0.0
  %1308 = vmatprep.subr.mxu0 0.0
  %1309 = vmatpush2.msra.mxu0 0.0
  %1310 = vmatprep.subr.mxu0 0.0
  %1311 = vmatpush2.msra.mxu0 0.0
  %1312 = vmatprep.mubr.f32.mxu0 0.0
  %1313 = vmatmul.mubr.f32.gmra.mxu0 %v1246
  %v1314 = vpop.f32.mrf.mxu0
  %v1315 = vadd.f32 0.0, %v1314
  %v1316 = vpop.f32.mrf.mxu0
  %1317 = vdwg.mxu0
  %v1318 = vadd.f32 %v1163, %v1315
  %v1319 = vadd.f32 %v1318, %v198
  %s1320 = scalar_lea.vmem %s1, 56
  %v1321 = vld [vmem:[%s1320] sm:$0xff]
  %v1322 = vmul.f32 %v1321, 0.35355338
  %v1323 = vadd.f32 %v1319, %v1322
  %s1324 = scalar_lea.vmem %s7, 64
  %1325 = vst.msk [vmem:[%s1324] sm:$0xff] %vm38, %v1323
  %v1326 = vld [vmem:[%s7 + $0x8] sm:$0xff]
  %v1327 = vld [vmem:[%s7 + $0x10] sm:$0xff]
  %v1328 = vld [vmem:[%s7 + $0x18] sm:$0xff]
  %v1329 = vld [vmem:[%s7 + $0x20] sm:$0xff]
  %v1330 = vld [vmem:[%s7 + $0x28] sm:$0xff]
  %v1331 = vld [vmem:[%s7 + $0x30] sm:$0xff]
  %v1332 = vld [vmem:[%s7 + $0x38] sm:$0xff]
  %v1333 = vld [vmem:[%s7 + $0x40] sm:$0xff]
  %v1334 = vld [vmem:[%s7] sm:$0xff]
  %v1335 = vld [vmem:[%s1] sm:$0xff]
  %v1336 = vld [vmem:[%s1 + $0x8] sm:$0xff]
  %v1337 = vld [vmem:[%s1 + $0x10] sm:$0xff]
  %v1338 = vld [vmem:[%s1 + $0x18] sm:$0xff]
  %v1339 = vld [vmem:[%s1 + $0x20] sm:$0xff]
  %v1340 = vld [vmem:[%s1 + $0x28] sm:$0xff]
  %v1341 = vld [vmem:[%s1 + $0x30] sm:$0xff]
  %v1342 = vld [vmem:[%s1 + $0x38] sm:$0xff]
  %v1343 = vmul.f32 %v1335, %v1335
  %v1344 = vmul.f32 %v1336, %v1336
  %v1345 = vmul.f32 %v1337, %v1337
  %v1346 = vmul.f32 %v1338, %v1338
  %v1347 = vmul.f32 %v1339, %v1339
  %v1348 = vmul.f32 %v1340, %v1340
  %v1349 = vmul.f32 %v1341, %v1341
  %v1350 = vmul.f32 %v1342, %v1342
  %v1351 = vsel %vm38, %v1343, 0.0
  %1352 = vadd.xlane.f32.xlu0 %v1351
  %v1353 = vpop.xlane.xlu0 %1352
  %v1354 = vsel %vm38, %v1344, 0.0
  %1355 = vadd.xlane.f32.xlu0 %v1354
  %v1356 = vpop.xlane.xlu0 %1355
  %v1357 = vsel %vm38, %v1345, 0.0
  %1358 = vadd.xlane.f32.xlu0 %v1357
  %v1359 = vpop.xlane.xlu0 %1358
  %v1360 = vsel %vm38, %v1346, 0.0
  %1361 = vadd.xlane.f32.xlu0 %v1360
  %v1362 = vpop.xlane.xlu0 %1361
  %v1363 = vsel %vm38, %v1347, 0.0
  %1364 = vadd.xlane.f32.xlu0 %v1363
  %v1365 = vpop.xlane.xlu0 %1364
  %v1366 = vsel %vm38, %v1348, 0.0
  %1367 = vadd.xlane.f32.xlu0 %v1366
  %v1368 = vpop.xlane.xlu0 %1367
  %v1369 = vsel %vm38, %v1349, 0.0
  %1370 = vadd.xlane.f32.xlu0 %v1369
  %v1371 = vpop.xlane.xlu0 %1370
  %v1372 = vsel %vm38, %v1350, 0.0
  %1373 = vadd.xlane.f32.xlu0 %v1372
  %v1374 = vpop.xlane.xlu0 %1373
  %v1375 = vmul.f32 %v1353, 0.5
  %v1376 = vmul.f32 %v1356, 0.5
  %v1377 = vmul.f32 %v1359, 0.5
  %v1378 = vmul.f32 %v1362, 0.5
  %v1379 = vmul.f32 %v1365, 0.5
  %v1380 = vmul.f32 %v1368, 0.5
  %v1381 = vmul.f32 %v1371, 0.5
  %v1382 = vmul.f32 %v1374, 0.5
  %v1383 = vsub.f32 3.8650317, %v1375
  %v1384 = vsub.f32 3.8650317, %v1376
  %v1385 = vsub.f32 3.8650317, %v1377
  %v1386 = vsub.f32 3.8650317, %v1378
  %v1387 = vsub.f32 3.8650317, %v1379
  %v1388 = vsub.f32 3.8650317, %v1380
  %v1389 = vsub.f32 3.8650317, %v1381
  %v1390 = vsub.f32 3.8650317, %v1382
  %s1391 = scalar_lea.vmem %s2, 32
  %v1392 = vld [vmem:[%s1391] sm:$0xff]
  %v1393 = vld [vmem:[%s1391 + $0x8] sm:$0xff]
  %v1394 = vld [vmem:[%s1391 + $0x10] sm:$0xff]
  %v1395 = vld [vmem:[%s1391 + $0x18] sm:$0xff]
  %v1396 = vld [vmem:[%s6] sm:$0xff]
  %v1397 = vld [vmem:[%s6 + $0x8] sm:$0xff]
  %v1398 = vld [vmem:[%s6 + $0x10] sm:$0xff]
  %v1399 = vld [vmem:[%s6 + $0x18] sm:$0xff]
  %v1400 = vld [vmem:[%s6 + $0x20] sm:$0xff]
  %v1401 = vld [vmem:[%s6 + $0x28] sm:$0xff]
  %v1402 = vld [vmem:[%s6 + $0x30] sm:$0xff]
  %v1403 = vld [vmem:[%s6 + $0x38] sm:$0xff]
  %v1405 = vsel %vm38, %v1326, 0
  %v1408 = vsel %vm38, %v1327, 0
  %v1411 = vsel %vm38, %v1328, 0
  %v1414 = vsel %vm38, %v1329, 0
  %v1417 = vsel %vm38, %v1330, 0
  %v1420 = vsel %vm38, %v1331, 0
  %v1423 = vsel %vm38, %v1332, 0
  %v1426 = vsel %vm38, %v1333, 0
  %1428 = vmatprep.subr.mxu0 0.0
  %1429 = vmatpush1.msra.mxu0 0.0
  %1430 = vmatprep.subr.mxu0 0.0
  %1431 = vmatpush1.msra.mxu0 0.0
  %1432 = vmatprep.subr.mxu0 0.0
  %1433 = vmatpush1.msra.mxu0 0.0
  %1434 = vmatprep.subr.mxu0 0.0
  %1435 = vmatpush1.msra.mxu0 0.0
  %1436 = vmatprep.subr.mxu0 0.0
  %1437 = vmatpush1.msra.mxu0 0.0
  %1438 = vmatprep.subr.mxu0 0.0
  %1439 = vmatpush1.msra.mxu0 0.0
  %1440 = vmatprep.subr.mxu0 0.0
  %1441 = vmatpush1.msra.mxu0 0.0
  %1442 = vmatprep.subr.mxu0 0.0
  %1443 = vmatpush1.msra.mxu0 0.0
  %1444 = vmatprep.subr.mxu0 0.0
  %1445 = vmatpush1.msra.mxu0 0.0
  %1446 = vmatprep.subr.mxu0 0.0
  %1447 = vmatpush1.msra.mxu0 0.0
  %1448 = vmatprep.subr.mxu0 0.0
  %1449 = vmatpush1.msra.mxu0 0.0
  %1450 = vmatprep.subr.mxu0 0.0
  %1451 = vmatpush1.msra.mxu0 0.0
  %1452 = vmatprep.subr.mxu0 0.0
  %1453 = vmatpush1.msra.mxu0 %v1395
  %1454 = vmatprep.subr.mxu0 0.0
  %1455 = vmatpush1.msra.mxu0 %v1394
  %1456 = vmatprep.subr.mxu0 0.0
  %1457 = vmatpush1.msra.mxu0 %v1393
  %1458 = vmatprep.subr.mxu0 0.0
  %1459 = vmatpush1.msra.mxu0 %v1392
  %1460 = vmatprep.subr.mxu0 0.0
  %1461 = vmatpush2.msra.mxu0 0.0
  %1462 = vmatprep.subr.mxu0 0.0
  %1463 = vmatpush2.msra.mxu0 0.0
  %1464 = vmatprep.subr.mxu0 0.0
  %1465 = vmatpush2.msra.mxu0 0.0
  %1466 = vmatprep.subr.mxu0 0.0
  %1467 = vmatpush2.msra.mxu0 0.0
  %1468 = vmatprep.subr.mxu0 0.0
  %1469 = vmatpush2.msra.mxu0 0.0
  %1470 = vmatprep.subr.mxu0 0.0
  %1471 = vmatpush2.msra.mxu0 0.0
  %1472 = vmatprep.subr.mxu0 0.0
  %1473 = vmatpush2.msra.mxu0 0.0
  %1474 = vmatprep.subr.mxu0 0.0
  %1475 = vmatpush2.msra.mxu0 0.0
  %1476 = vmatprep.subr.mxu0 0.0
  %1477 = vmatpush2.msra.mxu0 0.0
  %1478 = vmatprep.subr.mxu0 0.0
  %1479 = vmatpush2.msra.mxu0 0.0
  %1480 = vmatprep.subr.mxu0 0.0
  %1481 = vmatpush2.msra.mxu0 0.0
  %1482 = vmatprep.subr.mxu0 0.0
  %1483 = vmatpush2.msra.mxu0 0.0
  %1484 = vmatprep.subr.mxu0 0.0
  %1485 = vmatpush2.msra.mxu0 0.0
  %1486 = vmatprep.subr.mxu0 0.0
  %1487 = vmatpush2.msra.mxu0 0.0
  %1488 = vmatprep.subr.mxu0 0.0
  %1489 = vmatpush2.msra.mxu0 0.0
  %1490 = vmatprep.subr.mxu0 0.0
  %1491 = vmatpush2.msra.mxu0 0.0
  %1492 = vmatprep.mubr.f32.mxu0 0.0
  %1493 = vmatmul.mubr.f32.gmra.mxu0 %v1405
  %v1494 = vpop.f32.mrf.mxu0
  %v1495 = vadd.f32 %v1396, %v1494
  %v1496 = vpop.f32.mrf.mxu0
  %1497 = vmatprep.mubr.f32.mxu0 0.0
  %1498 = vmatmul.mubr.f32.gmra.mxu0 %v1408
  %v1499 = vpop.f32.mrf.mxu0
  %v1500 = vadd.f32 %v1397, %v1499
  %v1501 = vpop.f32.mrf.mxu0
  %1502 = vmatprep.mubr.f32.mxu0 0.0
  %1503 = vmatmul.mubr.f32.gmra.mxu0 %v1411
  %v1504 = vpop.f32.mrf.mxu0
  %v1505 = vadd.f32 %v1398, %v1504
  %v1506 = vpop.f32.mrf.mxu0
  %1507 = vmatprep.mubr.f32.mxu0 0.0
  %1508 = vmatmul.mubr.f32.gmra.mxu0 %v1414
  %v1509 = vpop.f32.mrf.mxu0
  %v1510 = vadd.f32 %v1399, %v1509
  %v1511 = vpop.f32.mrf.mxu0
  %1512 = vmatprep.mubr.f32.mxu0 0.0
  %1513 = vmatmul.mubr.f32.gmra.mxu0 %v1417
  %v1514 = vpop.f32.mrf.mxu0
  %v1515 = vadd.f32 %v1400, %v1514
  %v1516 = vpop.f32.mrf.mxu0
  %1517 = vmatprep.mubr.f32.mxu0 0.0
  %1518 = vmatmul.mubr.f32.gmra.mxu0 %v1420
  %v1519 = vpop.f32.mrf.mxu0
  %v1520 = vadd.f32 %v1401, %v1519
  %v1521 = vpop.f32.mrf.mxu0
  %1522 = vmatprep.mubr.f32.mxu0 0.0
  %1523 = vmatmul.mubr.f32.gmra.mxu0 %v1423
  %v1524 = vpop.f32.mrf.mxu0
  %v1525 = vadd.f32 %v1402, %v1524
  %v1526 = vpop.f32.mrf.mxu0
  %1527 = vmatprep.mubr.f32.mxu0 0.0
  %1528 = vmatmul.mubr.f32.gmra.mxu0 %v1426
  %v1529 = vpop.f32.mrf.mxu0
  %v1530 = vadd.f32 %v1403, %v1529
  %v1531 = vpop.f32.mrf.mxu0
  %1532 = vdwg.mxu0
  %v1533 = vtanh.pop %v1495
  %v1534 = vtanh.pop %v1500
  %v1535 = vtanh.pop %v1505
  %v1536 = vtanh.pop %v1510
  %v1537 = vtanh.pop %v1515
  %v1538 = vtanh.pop %v1520
  %v1539 = vtanh.pop %v1525
  %v1540 = vtanh.pop %v1530
  %s1541 = scalar_lea.vmem %s3, 32
  %v1542 = vld [vmem:[%s1541] sm:$0xff]
  %v1543 = vld [vmem:[%s1541 + $0x8] sm:$0xff]
  %v1544 = vld [vmem:[%s1541 + $0x10] sm:$0xff]
  %v1545 = vld [vmem:[%s1541 + $0x18] sm:$0xff]
  %s1546 = scalar_lea.vmem %s4, 1
  %v1547 = vld [vmem:[%s1546] sm:$0x1]
  %v1549 = vlaneseq
  %v1550 = vshrl.u32 %v1549, 7
  %v1551 = vsub.s32 0, %v1550
  %v1552 = vrot.slane %v1547, %v1551
  %v1555 = vsel %vm38, %v1533, 0
  %v1558 = vsel %vm38, %v1534, 0
  %v1561 = vsel %vm38, %v1535, 0
  %v1564 = vsel %vm38, %v1536, 0
  %v1567 = vsel %vm38, %v1537, 0
  %v1570 = vsel %vm38, %v1538, 0
  %v1573 = vsel %vm38, %v1539, 0
  %v1576 = vsel %vm38, %v1540, 0
  %1578 = vmatprep.subr.mxu0 0.0
  %1579 = vmatpush1.msra.mxu0 0.0
  %1580 = vmatprep.subr.mxu0 0.0
  %1581 = vmatpush1.msra.mxu0 0.0
  %1582 = vmatprep.subr.mxu0 0.0
  %1583 = vmatpush1.msra.mxu0 0.0
  %1584 = vmatprep.subr.mxu0 0.0
  %1585 = vmatpush1.msra.mxu0 0.0
  %1586 = vmatprep.subr.mxu0 0.0
  %1587 = vmatpush1.msra.mxu0 0.0
  %1588 = vmatprep.subr.mxu0 0.0
  %1589 = vmatpush1.msra.mxu0 0.0
  %1590 = vmatprep.subr.mxu0 0.0
  %1591 = vmatpush1.msra.mxu0 0.0
  %1592 = vmatprep.subr.mxu0 0.0
  %1593 = vmatpush1.msra.mxu0 0.0
  %1594 = vmatprep.subr.mxu0 0.0
  %1595 = vmatpush1.msra.mxu0 0.0
  %1596 = vmatprep.subr.mxu0 0.0
  %1597 = vmatpush1.msra.mxu0 0.0
  %1598 = vmatprep.subr.mxu0 0.0
  %1599 = vmatpush1.msra.mxu0 0.0
  %1600 = vmatprep.subr.mxu0 0.0
  %1601 = vmatpush1.msra.mxu0 0.0
  %1602 = vmatprep.subr.mxu0 0.0
  %1603 = vmatpush1.msra.mxu0 %v1545
  %1604 = vmatprep.subr.mxu0 0.0
  %1605 = vmatpush1.msra.mxu0 %v1544
  %1606 = vmatprep.subr.mxu0 0.0
  %1607 = vmatpush1.msra.mxu0 %v1543
  %1608 = vmatprep.subr.mxu0 0.0
  %1609 = vmatpush1.msra.mxu0 %v1542
  %1610 = vmatprep.subr.mxu0 0.0
  %1611 = vmatpush2.msra.mxu0 0.0
  %1612 = vmatprep.subr.mxu0 0.0
  %1613 = vmatpush2.msra.mxu0 0.0
  %1614 = vmatprep.subr.mxu0 0.0
  %1615 = vmatpush2.msra.mxu0 0.0
  %1616 = vmatprep.subr.mxu0 0.0
  %1617 = vmatpush2.msra.mxu0 0.0
  %1618 = vmatprep.subr.mxu0 0.0
  %1619 = vmatpush2.msra.mxu0 0.0
  %1620 = vmatprep.subr.mxu0 0.0
  %1621 = vmatpush2.msra.mxu0 0.0
  %1622 = vmatprep.subr.mxu0 0.0
  %1623 = vmatpush2.msra.mxu0 0.0
  %1624 = vmatprep.subr.mxu0 0.0
  %1625 = vmatpush2.msra.mxu0 0.0
  %1626 = vmatprep.subr.mxu0 0.0
  %1627 = vmatpush2.msra.mxu0 0.0
  %1628 = vmatprep.subr.mxu0 0.0
  %1629 = vmatpush2.msra.mxu0 0.0
  %1630 = vmatprep.subr.mxu0 0.0
  %1631 = vmatpush2.msra.mxu0 0.0
  %1632 = vmatprep.subr.mxu0 0.0
  %1633 = vmatpush2.msra.mxu0 0.0
  %1634 = vmatprep.subr.mxu0 0.0
  %1635 = vmatpush2.msra.mxu0 0.0
  %1636 = vmatprep.subr.mxu0 0.0
  %1637 = vmatpush2.msra.mxu0 0.0
  %1638 = vmatprep.subr.mxu0 0.0
  %1639 = vmatpush2.msra.mxu0 0.0
  %1640 = vmatprep.subr.mxu0 0.0
  %1641 = vmatpush2.msra.mxu0 0.0
  %1642 = vmatprep.mubr.f32.mxu0 0.0
  %1643 = vmatmul.mubr.f32.gmra.mxu0 %v1555
  %v1644 = vpop.f32.mrf.mxu0
  %v1645 = vadd.f32 %v1552, %v1644
  %v1646 = vpop.f32.mrf.mxu0
  %1647 = vmatprep.mubr.f32.mxu0 0.0
  %1648 = vmatmul.mubr.f32.gmra.mxu0 %v1558
  %v1649 = vpop.f32.mrf.mxu0
  %v1650 = vadd.f32 %v1552, %v1649
  %v1651 = vpop.f32.mrf.mxu0
  %1652 = vmatprep.mubr.f32.mxu0 0.0
  %1653 = vmatmul.mubr.f32.gmra.mxu0 %v1561
  %v1654 = vpop.f32.mrf.mxu0
  %v1655 = vadd.f32 %v1552, %v1654
  %v1656 = vpop.f32.mrf.mxu0
  %1657 = vmatprep.mubr.f32.mxu0 0.0
  %1658 = vmatmul.mubr.f32.gmra.mxu0 %v1564
  %v1659 = vpop.f32.mrf.mxu0
  %v1660 = vadd.f32 %v1552, %v1659
  %v1661 = vpop.f32.mrf.mxu0
  %1662 = vmatprep.mubr.f32.mxu0 0.0
  %1663 = vmatmul.mubr.f32.gmra.mxu0 %v1567
  %v1664 = vpop.f32.mrf.mxu0
  %v1665 = vadd.f32 %v1552, %v1664
  %v1666 = vpop.f32.mrf.mxu0
  %1667 = vmatprep.mubr.f32.mxu0 0.0
  %1668 = vmatmul.mubr.f32.gmra.mxu0 %v1570
  %v1669 = vpop.f32.mrf.mxu0
  %v1670 = vadd.f32 %v1552, %v1669
  %v1671 = vpop.f32.mrf.mxu0
  %1672 = vmatprep.mubr.f32.mxu0 0.0
  %1673 = vmatmul.mubr.f32.gmra.mxu0 %v1573
  %v1674 = vpop.f32.mrf.mxu0
  %v1675 = vadd.f32 %v1552, %v1674
  %v1676 = vpop.f32.mrf.mxu0
  %1677 = vmatprep.mubr.f32.mxu0 0.0
  %1678 = vmatmul.mubr.f32.gmra.mxu0 %v1576
  %v1679 = vpop.f32.mrf.mxu0
  %v1680 = vadd.f32 %v1552, %v1679
  %v1681 = vpop.f32.mrf.mxu0
  %1682 = vdwg.mxu0
  %v1683 = vsub.f32 %v1326, %v1645
  %v1684 = vsub.f32 %v1327, %v1650
  %v1685 = vsub.f32 %v1328, %v1655
  %v1686 = vsub.f32 %v1329, %v1660
  %v1687 = vsub.f32 %v1330, %v1665
  %v1688 = vsub.f32 %v1331, %v1670
  %v1689 = vsub.f32 %v1332, %v1675
  %v1690 = vsub.f32 %v1333, %v1680
  %v1691 = vsub.f32 %v1334, %v1683
  %v1692 = vsub.f32 %v1326, %v1684
  %v1693 = vsub.f32 %v1327, %v1685
  %v1694 = vsub.f32 %v1328, %v1686
  %v1695 = vsub.f32 %v1329, %v1687
  %v1696 = vsub.f32 %v1330, %v1688
  %v1697 = vsub.f32 %v1331, %v1689
  %v1698 = vsub.f32 %v1332, %v1690
  %v1699 = vmul.f32 %v1691, %v1691
  %v1700 = vmul.f32 %v1692, %v1692
  %v1701 = vmul.f32 %v1693, %v1693
  %v1702 = vmul.f32 %v1694, %v1694
  %v1703 = vmul.f32 %v1695, %v1695
  %v1704 = vmul.f32 %v1696, %v1696
  %v1705 = vmul.f32 %v1697, %v1697
  %v1706 = vmul.f32 %v1698, %v1698
  %v1707 = vsel %vm38, %v1699, 0.0
  %1708 = vadd.xlane.f32.xlu0 %v1707
  %v1709 = vpop.xlane.xlu0 %1708
  %v1710 = vsel %vm38, %v1700, 0.0
  %1711 = vadd.xlane.f32.xlu0 %v1710
  %v1712 = vpop.xlane.xlu0 %1711
  %v1713 = vsel %vm38, %v1701, 0.0
  %1714 = vadd.xlane.f32.xlu0 %v1713
  %v1715 = vpop.xlane.xlu0 %1714
  %v1716 = vsel %vm38, %v1702, 0.0
  %1717 = vadd.xlane.f32.xlu0 %v1716
  %v1718 = vpop.xlane.xlu0 %1717
  %v1719 = vsel %vm38, %v1703, 0.0
  %1720 = vadd.xlane.f32.xlu0 %v1719
  %v1721 = vpop.xlane.xlu0 %1720
  %v1722 = vsel %vm38, %v1704, 0.0
  %1723 = vadd.xlane.f32.xlu0 %v1722
  %v1724 = vpop.xlane.xlu0 %1723
  %v1725 = vsel %vm38, %v1705, 0.0
  %1726 = vadd.xlane.f32.xlu0 %v1725
  %v1727 = vpop.xlane.xlu0 %1726
  %v1728 = vsel %vm38, %v1706, 0.0
  %1729 = vadd.xlane.f32.xlu0 %v1728
  %v1730 = vpop.xlane.xlu0 %1729
  %v1731 = vmul.f32 %v1709, 4.0
  %v1732 = vmul.f32 %v1712, 4.0
  %v1733 = vmul.f32 %v1715, 4.0
  %v1734 = vmul.f32 %v1718, 4.0
  %v1735 = vmul.f32 %v1721, 4.0
  %v1736 = vmul.f32 %v1724, 4.0
  %v1737 = vmul.f32 %v1727, 4.0
  %v1738 = vmul.f32 %v1730, 4.0
  %v1739 = vsub.f32 3.8650317, %v1731
  %v1740 = vsub.f32 3.8650317, %v1732
  %v1741 = vsub.f32 3.8650317, %v1733
  %v1742 = vsub.f32 3.8650317, %v1734
  %v1743 = vsub.f32 3.8650317, %v1735
  %v1744 = vsub.f32 3.8650317, %v1736
  %v1745 = vsub.f32 3.8650317, %v1737
  %v1746 = vsub.f32 3.8650317, %v1738
  %vm1747 = vcmask 7168
  %v1748 = vsel %vm1747, %v1383, %v1739
  %v1749 = vsel %vm1747, %v1384, %v1740
  %v1750 = vsel %vm1747, %v1385, %v1741
  %v1751 = vsel %vm1747, %v1386, %v1742
  %v1752 = vsel %vm1747, %v1387, %v1743
  %v1753 = vsel %vm1747, %v1388, %v1744
  %v1754 = vsel %vm1747, %v1389, %v1745
  %v1755 = vsel %vm1747, %v1390, %v1746
  %vm1756 = vcmask 15360
  %1757 = vst.msk [vmem:[%s8] sm:$0xff] %vm1756, %v1748
  %1758 = vst.msk [vmem:[%s8 + $0x8] sm:$0xff] %vm1756, %v1749
  %1759 = vst.msk [vmem:[%s8 + $0x10] sm:$0xff] %vm1756, %v1750
  %1760 = vst.msk [vmem:[%s8 + $0x18] sm:$0xff] %vm1756, %v1751
  %1761 = vst.msk [vmem:[%s8 + $0x20] sm:$0xff] %vm1756, %v1752
  %1762 = vst.msk [vmem:[%s8 + $0x28] sm:$0xff] %vm1756, %v1753
  %1763 = vst.msk [vmem:[%s8 + $0x30] sm:$0xff] %vm1756, %v1754
  %1764 = vst.msk [vmem:[%s8 + $0x38] sm:$0xff] %vm1756, %v1755
  // Predicated region
  $region30: #{tpu_custom_call.1} parent=0 // pred_check
    _
  $region31: #{tpu_custom_call.1} parent=0 // pred_check_branch
    %1766 = sbr.rel (0) target = $region33
  $region32: #{tpu_custom_call.1} parent=0 // pred_region
    _
  $region33: #{tpu_custom_call.1} parent=0 // pred_fallthru
    _
  // Predicated region
  $region34: #{tpu_custom_call.1} parent=0 // pred_check
    _
  $region35: #{tpu_custom_call.1} parent=0 // pred_check_branch
    %1768 = sbr.rel (0) target = $region37
  $region36: #{tpu_custom_call.1} parent=0 // pred_region
    _
  $region37: #{tpu_custom_call.1} parent=0 // pred_fallthru
    _
  // Predicated region
  $region38: #{tpu_custom_call.1} parent=0 // pred_check
    _
  $region39: #{tpu_custom_call.1} parent=0 // pred_check_branch
    %1770 = sbr.rel (0) target = $region41
  $region40: #{tpu_custom_call.1} parent=0 // pred_region
    _
  $region41: #{tpu_custom_call.1} parent=0 // pred_fallthru
    _
  // Predicated region
  $region42: #{tpu_custom_call.1} parent=0 // pred_check
    _
  $region43: #{tpu_custom_call.1} parent=0 // pred_check_branch
    %1772 = sbr.rel (0) target = $region45
  $region44: #{tpu_custom_call.1} parent=0 // pred_region
    _
  $region45: #{tpu_custom_call.1} parent=0 // pred_fallthru
    _

</llo_original>
